<compile_context>
chip_gen: v7x
topology: tpu7x:2x2x1
jax: 0.10.0
libtpu: 0.0.40
codegen_flags: <defaults>
</compile_context>

<pallas_src>
import jax
import jax.numpy as jnp
from jax.experimental import pallas as pl
from jax.experimental.pallas import tpu as pltpu


# ----------------------------------------------------------------------------
# Kernel: 6 matmuls + bias + ReLU + Tanh for one (TM, 512) batch tile.
# All weights are pre-transposed to [in, out] and BN-folded; biases are (1, out) f32.
# ----------------------------------------------------------------------------
def _ae_kernel(x_ref,
               w1, b1, w2, b2, w3, b3,      # encoder
               w4, b4, w5, b5, w6, b6,      # decoder
               o_ref):
    cdt = w1.dtype                           # matmul compute dtype (f32 or bf16)
    h = x_ref[...].astype(cdt)

    # ---------------- encoder ----------------
    h = jnp.maximum(jnp.dot(h, w1[...], preferred_element_type=jnp.float32) + b1[...], 0.0)
    h = jnp.maximum(jnp.dot(h.astype(cdt), w2[...], preferred_element_type=jnp.float32) + b2[...], 0.0)
    h = jnp.dot(h.astype(cdt), w3[...], preferred_element_type=jnp.float32) + b3[...]

    # ---------------- decoder ----------------
    h = jnp.maximum(jnp.dot(h.astype(cdt), w4[...], preferred_element_type=jnp.float32) + b4[...], 0.0)
    h = jnp.maximum(jnp.dot(h.astype(cdt), w5[...], preferred_element_type=jnp.float32) + b5[...], 0.0)
    h = jnp.dot(h.astype(cdt), w6[...], preferred_element_type=jnp.float32) + b6[...]

    o_ref[...] = jnp.tanh(h).astype(o_ref.dtype)


# ----------------------------------------------------------------------------
# One-time parameter preparation: fold BN (inference mode) into Linear, transpose
# to [in, out], pick the matmul compute dtype.  Do this OUTSIDE the per-call path.
# ----------------------------------------------------------------------------
def fold_params(params, *, eps=1e-5, compute_dtype=jnp.float32):
    def fold(lin, bn=None):
        w = jnp.asarray(params[lin + "_w"], jnp.float32)     # [out, in] (PyTorch layout)
        b = jnp.asarray(params[lin + "_b"], jnp.float32)     # [out]
        if bn is not None:
            g = jnp.asarray(params[bn + "_gamma"], jnp.float32)
            beta = jnp.asarray(params[bn + "_beta"], jnp.float32)
            m = jnp.asarray(params[bn + "_mean"], jnp.float32)
            v = jnp.asarray(params[bn + "_var"], jnp.float32)
            scale = g / jnp.sqrt(v + eps)                     # BN inference affine
            w = w * scale[:, None]                            # fold into weights
            b = b * scale + (beta - m * scale)                # fold into bias
        return w.T.astype(compute_dtype), b.reshape(1, -1).astype(jnp.float32)

    ops = []
    for lin, bn in (("enc1", "bn1"), ("enc2", "bn2"), ("enc3", None),
                    ("dec1", "bn4"), ("dec2", "bn5"), ("dec3", None)):
        w, b = fold(lin, bn)
        ops.append(w)
        ops.append(b)
    return tuple(ops)


# ----------------------------------------------------------------------------
# Batch-tile selection.
#   * large B  -> 1024-row tiles (near HBM roofline, tiny per-step overhead share)
#   * small B  -> split into >=2 tiles so v7x's two TensorCores both get work
#   * tile rows multiple of 8 (f32) / 16 (bf16 packed sublanes)
# ----------------------------------------------------------------------------
def _round_up(x, m):
    return ((x + m - 1) // m) * m


def _default_tm(B, x_dtype):
    mult = 16 if jnp.dtype(x_dtype) == jnp.bfloat16 else 8
    if B >= 2048:
        return 1024
    if B >= 2 * mult:
        return min(1024, _round_up(pl.cdiv(B, 2), mult))
    return B                       # tiny batch: one full-array block


# ----------------------------------------------------------------------------
# Wrapper: batch-tiled pallas_call.  Weights stay VMEM-resident across grid
# steps via constant index_maps; x / out blocks are auto double-buffered.
# ----------------------------------------------------------------------------
def autoencoder_forward(x, folded, *, tm=None, out_dtype=jnp.float32):
    B, F = x.shape
    assert F == 512, "autoencoder_MNIST_512_features expects 512 input features"

    if tm is None:
        tm = _default_tm(B, x.dtype)
    grid = (pl.cdiv(B, tm),)

    in_specs = [pl.BlockSpec((tm, F), lambda i: (i, 0))]                     # x: batch-tiled
    in_specs += [pl.BlockSpec(op.shape, lambda i: (0, 0)) for op in folded]  # weights: resident
    out_spec = pl.BlockSpec((tm, 512), lambda i: (i, 0))

    # Advisory cost estimate for XLA's scheduler (HBM-bound kernel).
    code = folded[4].shape[1]
    flops_per_row = 2 * (512 * 128 + 128 * 64 + 64 * code + code * 64 + 64 * 128 + 128 * 512)
    x_bytes = B * F * jnp.dtype(x.dtype).itemsize
    out_bytes = B * 512 * jnp.dtype(out_dtype).itemsize
    w_bytes = sum(int(op.size) * jnp.dtype(op.dtype).itemsize for op in folded)
    cost = pl.CostEstimate(flops=B * flops_per_row,
                           transcendentals=B * 512,
                           bytes_accessed=x_bytes + out_bytes + w_bytes)

    return pl.pallas_call(
        _ae_kernel,
        out_shape=jax.ShapeDtypeStruct((B, 512), out_dtype),
        grid=grid,
        in_specs=in_specs,
        out_specs=out_spec,
        compiler_params=pltpu.CompilerParams(
            dimension_semantics=("parallel",),       # v7x: batch tiles split across 2 TCs
        ),
        cost_estimate=cost,
    )(x, *folded)


# ----------------------------------------------------------------------------
# Deterministic parameter construction (synthetic, no checkpoint).
# ----------------------------------------------------------------------------
def make_params(code_size, key):
    dims = {
        "enc1": (512, 128), "enc2": (128, 64), "enc3": (64, code_size),
        "dec1": (code_size, 64), "dec2": (64, 128), "dec3": (128, 512),
    }
    bn_dims = {"bn1": 128, "bn2": 64, "bn4": 64, "bn5": 128}
    params = {}
    keys = jax.random.split(key, 2 * len(dims) + 4 * len(bn_dims))
    ki = 0
    for name, (fin, fout) in dims.items():
        params[name + "_w"] = 0.05 * jax.random.normal(keys[ki], (fout, fin), jnp.float32); ki += 1
        params[name + "_b"] = 0.05 * jax.random.normal(keys[ki], (fout,), jnp.float32); ki += 1
    for name, n in bn_dims.items():
        params[name + "_gamma"] = 1.0 + 0.1 * jax.random.normal(keys[ki], (n,), jnp.float32); ki += 1
        params[name + "_beta"] = 0.1 * jax.random.normal(keys[ki], (n,), jnp.float32); ki += 1
        params[name + "_mean"] = 0.1 * jax.random.normal(keys[ki], (n,), jnp.float32); ki += 1
        params[name + "_var"] = 0.5 + jax.random.uniform(keys[ki], (n,), jnp.float32); ki += 1
    return params


# ----------------------------------------------------------------------------
# Pure-JAX reference (unfolded BN, f32) for correctness checking.
# ----------------------------------------------------------------------------
def reference_forward(x, params, eps=1e-5):
    def lin(h, name):
        return h @ params[name + "_w"].T + params[name + "_b"]

    def bn(h, name):
        g, b = params[name + "_gamma"], params[name + "_beta"]
        m, v = params[name + "_mean"], params[name + "_var"]
        return (h - m) * g / jnp.sqrt(v + eps) + b

    h = jax.nn.relu(bn(lin(x, "enc1"), "bn1"))
    h = jax.nn.relu(bn(lin(h, "enc2"), "bn2"))
    h = lin(h, "enc3")
    h = jax.nn.relu(bn(lin(h, "dec1"), "bn4"))
    h = jax.nn.relu(bn(lin(h, "dec2"), "bn5"))
    return jnp.tanh(lin(h, "dec3"))


if __name__ == "__main__":
    code_size = 32
    batch = 64             # small test shape; tm selection splits it into 2 grid steps

    key = jax.random.PRNGKey(0)
    k_x, k_p = jax.random.split(key)
    x = jax.random.normal(k_x, (batch, 512), jnp.float32)
    params = make_params(code_size, k_p)
    ref = reference_forward(x, params)

    # --- f32 compute / f32 output (tight tolerance; BN folding only reorders rounding) ---
    folded_f32 = fold_params(params, compute_dtype=jnp.float32)
    out_f32 = jax.block_until_ready(autoencoder_forward(x, folded_f32))
    assert out_f32.shape == (batch, 512) and out_f32.dtype == jnp.float32
    assert jnp.allclose(out_f32, ref, atol=1e-4, rtol=1e-4), "f32 mismatch vs reference"

    # --- bf16 I/O path (halves x read AND out write HBM streams; valid on v5e/v6e/v7x),
    #     f32 accumulation and elementwise math ---
    folded_bf16 = fold_params(params, compute_dtype=jnp.bfloat16)
    out_bf16 = jax.block_until_ready(
        autoencoder_forward(x.astype(jnp.bfloat16), folded_bf16, out_dtype=jnp.bfloat16))
    assert out_bf16.shape == (batch, 512) and out_bf16.dtype == jnp.bfloat16
    assert float(jnp.max(jnp.abs(out_bf16.astype(jnp.float32) - ref))) < 0.1, \
        "bf16 mismatch vs reference"

    print("KERNEL_OK")
</pallas_src>

<mosaic_0001>
module attributes {stable_mosaic.version = 11 : i64} {
  func.func @_ae_kernel(%arg0: i32, %arg1: memref<32x512xf32, #tpu.memory_space<vmem>>, %arg2: memref<512x128xf32, #tpu.memory_space<vmem>>, %arg3: memref<1x128xf32, #tpu.memory_space<vmem>>, %arg4: memref<128x64xf32, #tpu.memory_space<vmem>>, %arg5: memref<1x64xf32, #tpu.memory_space<vmem>>, %arg6: memref<64x32xf32, #tpu.memory_space<vmem>>, %arg7: memref<1x32xf32, #tpu.memory_space<vmem>>, %arg8: memref<32x64xf32, #tpu.memory_space<vmem>>, %arg9: memref<1x64xf32, #tpu.memory_space<vmem>>, %arg10: memref<64x128xf32, #tpu.memory_space<vmem>>, %arg11: memref<1x128xf32, #tpu.memory_space<vmem>>, %arg12: memref<128x512xf32, #tpu.memory_space<vmem>>, %arg13: memref<1x512xf32, #tpu.memory_space<vmem>>, %arg14: memref<32x512xf32, #tpu.memory_space<vmem>>) attributes {dimension_semantics = [#tpu.dimension_semantics<parallel>], iteration_bounds = array<i64: 2>, scalar_prefetch = 0 : i64, scratch_operands = 0 : i64, tpu.core_type = #tpu.core_type<tc>, window_params = [{transform_indices = @transform_0, window_bounds = array<i64: 32, 512>}, {pipeline_mode = #tpu.pipeline_mode<synchronous>, transform_indices = @transform_1, window_bounds = array<i64: 512, 128>}, {pipeline_mode = #tpu.pipeline_mode<synchronous>, transform_indices = @transform_2, window_bounds = array<i64: 1, 128>}, {pipeline_mode = #tpu.pipeline_mode<synchronous>, transform_indices = @transform_3, window_bounds = array<i64: 128, 64>}, {pipeline_mode = #tpu.pipeline_mode<synchronous>, transform_indices = @transform_4, window_bounds = array<i64: 1, 64>}, {pipeline_mode = #tpu.pipeline_mode<synchronous>, transform_indices = @transform_5, window_bounds = array<i64: 64, 32>}, {pipeline_mode = #tpu.pipeline_mode<synchronous>, transform_indices = @transform_6, window_bounds = array<i64: 1, 32>}, {pipeline_mode = #tpu.pipeline_mode<synchronous>, transform_indices = @transform_7, window_bounds = array<i64: 32, 64>}, {pipeline_mode = #tpu.pipeline_mode<synchronous>, transform_indices = @transform_8, window_bounds = array<i64: 1, 64>}, {pipeline_mode = #tpu.pipeline_mode<synchronous>, transform_indices = @transform_9, window_bounds = array<i64: 64, 128>}, {pipeline_mode = #tpu.pipeline_mode<synchronous>, transform_indices = @transform_10, window_bounds = array<i64: 1, 128>}, {pipeline_mode = #tpu.pipeline_mode<synchronous>, transform_indices = @transform_11, window_bounds = array<i64: 128, 512>}, {pipeline_mode = #tpu.pipeline_mode<synchronous>, transform_indices = @transform_12, window_bounds = array<i64: 1, 512>}, {transform_indices = @transform_13, window_bounds = array<i64: 32, 512>}]} {
    %c0 = arith.constant 0 : index
    %c0_0 = arith.constant 0 : index
    %0 = vector.load %arg1[%c0, %c0_0] : memref<32x512xf32, #tpu.memory_space<vmem>>, vector<32x512xf32>
    %c0_1 = arith.constant 0 : index
    %c0_2 = arith.constant 0 : index
    %1 = vector.load %arg2[%c0_1, %c0_2] : memref<512x128xf32, #tpu.memory_space<vmem>>, vector<512x128xf32>
    %cst = arith.constant dense<0.000000e+00> : vector<32x128xf32>
    %2 = tpu.matmul %0, %1, %cst {dimension_numbers = #tpu.dot_dimension_numbers<[1], [0], [0], [1], [0, 0, 1, 1], [], []>} : vector<32x512xf32>, vector<512x128xf32>, vector<32x128xf32> -> vector<32x128xf32>
    %c0_3 = arith.constant 0 : index
    %c0_4 = arith.constant 0 : index
    %3 = vector.load %arg3[%c0_3, %c0_4] : memref<1x128xf32, #tpu.memory_space<vmem>>, vector<1x128xf32>
    %4 = vector.broadcast %3 : vector<1x128xf32> to vector<32x128xf32>
    %5 = arith.addf %2, %4 : vector<32x128xf32>
    %cst_5 = arith.constant 0.000000e+00 : f32
    %6 = vector.broadcast %cst_5 : f32 to vector<32x128xf32>
    %7 = arith.maximumf %5, %6 : vector<32x128xf32>
    %c0_6 = arith.constant 0 : index
    %c0_7 = arith.constant 0 : index
    %8 = vector.load %arg4[%c0_6, %c0_7] : memref<128x64xf32, #tpu.memory_space<vmem>>, vector<128x64xf32>
    %cst_8 = arith.constant dense<0.000000e+00> : vector<32x64xf32>
    %9 = tpu.matmul %7, %8, %cst_8 {dimension_numbers = #tpu.dot_dimension_numbers<[1], [0], [0], [1], [0, 0, 1, 1], [], []>} : vector<32x128xf32>, vector<128x64xf32>, vector<32x64xf32> -> vector<32x64xf32>
    %c0_9 = arith.constant 0 : index
    %c0_10 = arith.constant 0 : index
    %10 = vector.load %arg5[%c0_9, %c0_10] : memref<1x64xf32, #tpu.memory_space<vmem>>, vector<1x64xf32>
    %11 = vector.broadcast %10 : vector<1x64xf32> to vector<32x64xf32>
    %12 = arith.addf %9, %11 : vector<32x64xf32>
    %cst_11 = arith.constant 0.000000e+00 : f32
    %13 = vector.broadcast %cst_11 : f32 to vector<32x64xf32>
    %14 = arith.maximumf %12, %13 : vector<32x64xf32>
    %c0_12 = arith.constant 0 : index
    %c0_13 = arith.constant 0 : index
    %15 = vector.load %arg6[%c0_12, %c0_13] : memref<64x32xf32, #tpu.memory_space<vmem>>, vector<64x32xf32>
    %cst_14 = arith.constant dense<0.000000e+00> : vector<32x32xf32>
    %16 = tpu.matmul %14, %15, %cst_14 {dimension_numbers = #tpu.dot_dimension_numbers<[1], [0], [0], [1], [0, 0, 1, 1], [], []>} : vector<32x64xf32>, vector<64x32xf32>, vector<32x32xf32> -> vector<32x32xf32>
    %c0_15 = arith.constant 0 : index
    %c0_16 = arith.constant 0 : index
    %17 = vector.load %arg7[%c0_15, %c0_16] : memref<1x32xf32, #tpu.memory_space<vmem>>, vector<1x32xf32>
    %18 = vector.broadcast %17 : vector<1x32xf32> to vector<32x32xf32>
    %19 = arith.addf %16, %18 : vector<32x32xf32>
    %c0_17 = arith.constant 0 : index
    %c0_18 = arith.constant 0 : index
    %20 = vector.load %arg8[%c0_17, %c0_18] : memref<32x64xf32, #tpu.memory_space<vmem>>, vector<32x64xf32>
    %cst_19 = arith.constant dense<0.000000e+00> : vector<32x64xf32>
    %21 = tpu.matmul %19, %20, %cst_19 {dimension_numbers = #tpu.dot_dimension_numbers<[1], [0], [0], [1], [0, 0, 1, 1], [], []>} : vector<32x32xf32>, vector<32x64xf32>, vector<32x64xf32> -> vector<32x64xf32>
    %c0_20 = arith.constant 0 : index
    %c0_21 = arith.constant 0 : index
    %22 = vector.load %arg9[%c0_20, %c0_21] : memref<1x64xf32, #tpu.memory_space<vmem>>, vector<1x64xf32>
    %23 = vector.broadcast %22 : vector<1x64xf32> to vector<32x64xf32>
    %24 = arith.addf %21, %23 : vector<32x64xf32>
    %cst_22 = arith.constant 0.000000e+00 : f32
    %25 = vector.broadcast %cst_22 : f32 to vector<32x64xf32>
    %26 = arith.maximumf %24, %25 : vector<32x64xf32>
    %c0_23 = arith.constant 0 : index
    %c0_24 = arith.constant 0 : index
    %27 = vector.load %arg10[%c0_23, %c0_24] : memref<64x128xf32, #tpu.memory_space<vmem>>, vector<64x128xf32>
    %cst_25 = arith.constant dense<0.000000e+00> : vector<32x128xf32>
    %28 = tpu.matmul %26, %27, %cst_25 {dimension_numbers = #tpu.dot_dimension_numbers<[1], [0], [0], [1], [0, 0, 1, 1], [], []>} : vector<32x64xf32>, vector<64x128xf32>, vector<32x128xf32> -> vector<32x128xf32>
    %c0_26 = arith.constant 0 : index
    %c0_27 = arith.constant 0 : index
    %29 = vector.load %arg11[%c0_26, %c0_27] : memref<1x128xf32, #tpu.memory_space<vmem>>, vector<1x128xf32>
    %30 = vector.broadcast %29 : vector<1x128xf32> to vector<32x128xf32>
    %31 = arith.addf %28, %30 : vector<32x128xf32>
    %cst_28 = arith.constant 0.000000e+00 : f32
    %32 = vector.broadcast %cst_28 : f32 to vector<32x128xf32>
    %33 = arith.maximumf %31, %32 : vector<32x128xf32>
    %c0_29 = arith.constant 0 : index
    %c0_30 = arith.constant 0 : index
    %34 = vector.load %arg12[%c0_29, %c0_30] : memref<128x512xf32, #tpu.memory_space<vmem>>, vector<128x512xf32>
    %cst_31 = arith.constant dense<0.000000e+00> : vector<32x512xf32>
    %35 = tpu.matmul %33, %34, %cst_31 {dimension_numbers = #tpu.dot_dimension_numbers<[1], [0], [0], [1], [0, 0, 1, 1], [], []>} : vector<32x128xf32>, vector<128x512xf32>, vector<32x512xf32> -> vector<32x512xf32>
    %c0_32 = arith.constant 0 : index
    %c0_33 = arith.constant 0 : index
    %36 = vector.load %arg13[%c0_32, %c0_33] : memref<1x512xf32, #tpu.memory_space<vmem>>, vector<1x512xf32>
    %37 = vector.broadcast %36 : vector<1x512xf32> to vector<32x512xf32>
    %38 = arith.addf %35, %37 : vector<32x512xf32>
    %39 = math.tanh %38 : vector<32x512xf32>
    %c0_34 = arith.constant 0 : index
    %c0_35 = arith.constant 0 : index
    %40 = vector.load %arg14[%c0_34, %c0_35] : memref<32x512xf32, #tpu.memory_space<vmem>>, vector<32x512xf32>
    tpu.vector_store %arg14[%c0_34, %c0_35], %39 {strides = array<i32>} : memref<32x512xf32, #tpu.memory_space<vmem>>, vector<32x512xf32>,
    return
  }
  func.func @transform_0(%arg0: i32) -> (i32, i32) {
    %c0_i32 = arith.constant 0 : i32
    %c0_i32_0 = arith.constant 0 : i32
    return %arg0, %c0_i32 : i32, i32
  }
  func.func @transform_1(%arg0: i32) -> (i32, i32) {
    %c0_i32 = arith.constant 0 : i32
    %c0_i32_0 = arith.constant 0 : i32
    %c0_i32_1 = arith.constant 0 : i32
    return %c0_i32, %c0_i32_0 : i32, i32
  }
  func.func @transform_2(%arg0: i32) -> (i32, i32) {
    %c0_i32 = arith.constant 0 : i32
    %c0_i32_0 = arith.constant 0 : i32
    %c0_i32_1 = arith.constant 0 : i32
    return %c0_i32, %c0_i32_0 : i32, i32
  }
  func.func @transform_3(%arg0: i32) -> (i32, i32) {
    %c0_i32 = arith.constant 0 : i32
    %c0_i32_0 = arith.constant 0 : i32
    %c0_i32_1 = arith.constant 0 : i32
    return %c0_i32, %c0_i32_0 : i32, i32
  }
  func.func @transform_4(%arg0: i32) -> (i32, i32) {
    %c0_i32 = arith.constant 0 : i32
    %c0_i32_0 = arith.constant 0 : i32
    %c0_i32_1 = arith.constant 0 : i32
    return %c0_i32, %c0_i32_0 : i32, i32
  }
  func.func @transform_5(%arg0: i32) -> (i32, i32) {
    %c0_i32 = arith.constant 0 : i32
    %c0_i32_0 = arith.constant 0 : i32
    %c0_i32_1 = arith.constant 0 : i32
    return %c0_i32, %c0_i32_0 : i32, i32
  }
  func.func @transform_6(%arg0: i32) -> (i32, i32) {
    %c0_i32 = arith.constant 0 : i32
    %c0_i32_0 = arith.constant 0 : i32
    %c0_i32_1 = arith.constant 0 : i32
    return %c0_i32, %c0_i32_0 : i32, i32
  }
  func.func @transform_7(%arg0: i32) -> (i32, i32) {
    %c0_i32 = arith.constant 0 : i32
    %c0_i32_0 = arith.constant 0 : i32
    %c0_i32_1 = arith.constant 0 : i32
    return %c0_i32, %c0_i32_0 : i32, i32
  }
  func.func @transform_8(%arg0: i32) -> (i32, i32) {
    %c0_i32 = arith.constant 0 : i32
    %c0_i32_0 = arith.constant 0 : i32
    %c0_i32_1 = arith.constant 0 : i32
    return %c0_i32, %c0_i32_0 : i32, i32
  }
  func.func @transform_9(%arg0: i32) -> (i32, i32) {
    %c0_i32 = arith.constant 0 : i32
    %c0_i32_0 = arith.constant 0 : i32
    %c0_i32_1 = arith.constant 0 : i32
    return %c0_i32, %c0_i32_0 : i32, i32
  }
  func.func @transform_10(%arg0: i32) -> (i32, i32) {
    %c0_i32 = arith.constant 0 : i32
    %c0_i32_0 = arith.constant 0 : i32
    %c0_i32_1 = arith.constant 0 : i32
    return %c0_i32, %c0_i32_0 : i32, i32
  }
  func.func @transform_11(%arg0: i32) -> (i32, i32) {
    %c0_i32 = arith.constant 0 : i32
    %c0_i32_0 = arith.constant 0 : i32
    %c0_i32_1 = arith.constant 0 : i32
    return %c0_i32, %c0_i32_0 : i32, i32
  }
  func.func @transform_12(%arg0: i32) -> (i32, i32) {
    %c0_i32 = arith.constant 0 : i32
    %c0_i32_0 = arith.constant 0 : i32
    %c0_i32_1 = arith.constant 0 : i32
    return %c0_i32, %c0_i32_0 : i32, i32
  }
  func.func @transform_13(%arg0: i32) -> (i32, i32) {
    %c0_i32 = arith.constant 0 : i32
    %c0_i32_0 = arith.constant 0 : i32
    return %arg0, %c0_i32 : i32, i32
  }
}

</mosaic_0001>

<llo_original>
// kernel: tpu_custom_call.1
$region0: #{tpu_custom_call.1}
  #allocation0 [shape = 'u32[]', space=smem, size = 0x4, offset = 0x4, fixed_abs, tag = 'smem constant byte address 0x4 - core index']
  #allocation1 [shape = 'u32[144,128]{1,0:T(1,128)}', space=vmem, size = 0x12000, scoped, tag = 'internal scratch']
  %s0 = inlined_call_operand.vmem [shape: f32[64,512], index: 0, kind: input, shape index: {}]
  %s1 = inlined_call_operand.hbm [shape: f32[512,128], index: 1, kind: input, shape index: {}]
  %s2 = inlined_call_operand.vmem [shape: f32[1,128], index: 2, kind: input, shape index: {}]
  %s3 = inlined_call_operand.vmem [shape: f32[128,64], index: 3, kind: input, shape index: {}]
  %s4 = inlined_call_operand.hbm [shape: f32[1,64], index: 4, kind: input, shape index: {}]
  %s5 = inlined_call_operand.vmem [shape: f32[64,32], index: 5, kind: input, shape index: {}]
  %s6 = inlined_call_operand.hbm [shape: f32[1,32], index: 6, kind: input, shape index: {}]
  %s7 = inlined_call_operand.hbm [shape: f32[32,64], index: 7, kind: input, shape index: {}]
  %s8 = inlined_call_operand.hbm [shape: f32[1,64], index: 8, kind: input, shape index: {}]
  %s9 = inlined_call_operand.vmem [shape: f32[64,128], index: 9, kind: input, shape index: {}]
  %s10 = inlined_call_operand.hbm [shape: f32[1,128], index: 10, kind: input, shape index: {}]
  %s11 = inlined_call_operand.hbm [shape: f32[128,512], index: 11, kind: input, shape index: {}]
  %s12 = inlined_call_operand.vmem [shape: f32[1,512], index: 12, kind: input, shape index: {}]
  %s13 = inlined_call_operand.hbm [shape: f32[64,512], index: 13, kind: output, shape index: {}]
  %s14 = sld [smem:[#allocation0]]
  $region113: #{tpu_custom_call.1} parent=0
    _
  %s16 = ssub.s32 1, %s14
  %s17 = scalar_select 0, %s16, %s14
  $region1: #{tpu_custom_call.1} parent=0
    #allocation2 [shape = 'u8[262144]{0}', space=vmem, size = 0x40000, scoped, tag = 'input window, operand 1, single buffered']
    #allocation3 [shape = 's32[2]{0}', space=sflag, size = 0x8, scoped, tag = 'scoped memory for tpu_custom_call.1']
    #allocation4 [shape = 's32[2]{0}', space=sflag, size = 0x8, scoped, tag = 'scoped memory for tpu_custom_call.1']
    #allocation5 [shape = 'u8[512]{0}', space=vmem, size = 0x400, scoped, tag = 'input window, operand 4, single buffered']
    #allocation6 [shape = 's32[1]{0}', space=sflag, size = 0x4, scoped, tag = 'scoped memory for tpu_custom_call.1']
    #allocation7 [shape = 'u8[512]{0}', space=vmem, size = 0x400, scoped, tag = 'input window, operand 6, single buffered']
    #allocation8 [shape = 'u8[16384]{0}', space=vmem, size = 0x4000, scoped, tag = 'input window, operand 7, single buffered']
    #allocation9 [shape = 's32[1]{0}', space=sflag, size = 0x4, scoped, tag = 'scoped memory for tpu_custom_call.1']
    #allocation10 [shape = 'u8[512]{0}', space=vmem, size = 0x400, scoped, tag = 'input window, operand 8, single buffered']
    #allocation11 [shape = 'u8[512]{0}', space=vmem, size = 0x400, scoped, tag = 'input window, operand 10, single buffered']
    #allocation12 [shape = 's32[1]{0}', space=sflag, size = 0x4, scoped, tag = 'scoped memory for tpu_custom_call.1']
    #allocation13 [shape = 'u8[262144]{0}', space=vmem, size = 0x40000, scoped, tag = 'input window, operand 11, single buffered']
    #allocation14 [shape = 'u8[131072]{0}', space=vmem, size = 0x20000, scoped, tag = 'output window, operand 0']
    %18 = vsyncpa [#allocation3], 0
    %19 = vsyncpa [#allocation6], 0
    %20 = vsyncpa [#allocation9], 0
    %21 = vsyncpa [#allocation12], 0
    %22 = vsyncpa [#allocation4], 0
    %s23 = scalar_lea.sflag [#allocation4], 1
    %24 = vsyncpa %s23, 0
    loop: start=0, step=1, limit=4
    $region2: #{tpu_custom_call.1} parent=1 // loop_pre_header
      _
    $region3: #{tpu_custom_call.1} parent=1 // loop_header
      %s26 = sphi 0, %s30
      %p27 = scmp.ge.s32.totalorder %s26, 4
      %s36 = sphi 0, %s38
      %s39 = sphi 0, %s36
      %s40 = sphi 0, %s39
      %s56 = sphi 0, %s40
      %s60 = sphi 0, %s60
      %s62 = sphi 0, %s60
      %s63 = sphi 0, %s62
      %s77 = sphi 0, %s63
      %s81 = sphi 0, %s81
      %s83 = sphi 0, %s81
      %s84 = sphi 0, %s83
      %s98 = sphi 0, %s84
      %s102 = sphi 0, %s102
      %s104 = sphi 0, %s102
      %s105 = sphi 0, %s104
      %s119 = sphi 0, %s105
      %s123 = sphi 0, %s123
      %s125 = sphi 0, %s123
      %s126 = sphi 0, %s125
      %s140 = sphi 0, %s126
      %s144 = sphi 0, %s144
      %s146 = sphi 0, %s144
      %s147 = sphi 0, %s146
      %s161 = sphi 0, %s147
      %s165 = sphi 0, %s165
      %s167 = sphi 0, %s165
      %s168 = sphi 0, %s167
      %s182 = sphi 0, %s168
      %s186 = sphi 0, %s186
      %s188 = sphi 0, %s186
      %s189 = sphi 0, %s188
      %s203 = sphi 0, %s189
      %s207 = sphi 0, %s207
      %s209 = sphi 0, %s207
      %s210 = sphi 0, %s209
      %s224 = sphi 0, %s210
      %s228 = sphi 0, %s228
      %s230 = sphi 0, %s228
      %s231 = sphi 0, %s230
      %s245 = sphi 0, %s231
      %s249 = sphi 0, %s249
      %s251 = sphi 0, %s249
      %s252 = sphi 0, %s251
      %s266 = sphi 0, %s252
      %s270 = sphi 0, %s270
      %s272 = sphi 0, %s270
      %s273 = sphi 0, %s272
      %s287 = sphi 0, %s273
      %s291 = sphi 0, %s291
      %s293 = sphi 0, %s291
      %s294 = sphi 0, %s293
      %s308 = sphi 0, %s294
      %s314 = sphi 0, %s316
      %s317 = sphi 0, %s314
      %s318 = sphi 0, %s317
      %s334 = sphi 0, %s318
    $region4: #{tpu_custom_call.1} parent=1 // loop_header_branch
      %29 = sbr.rel (%p27) target = $region8
    $region5: #{tpu_custom_call.1} parent=1 // loop_body
      %s31 = ssub.s32 %s26, 1
      %s32 = ssub.s32 %s26, 2
      %s33 = sadd.s32 %s26, 1
      %s34 = ssub.s32 %s26, %s33
      %p35 = scmp.eq.s32.totalorder %s34, 0
      %s37 = sadd.s32 %s36, 1
      %s38 = scalar_select %p35, %s36, %s37
      %p41 = pneg %p35
      %p42 = scmp.eq.s32.totalorder %s26, 1
      %p43 = por %p41, %p42
      %p44 = scmp.ne.s32.totalorder %s36, %s39
      %p45 = scmp.eq.s32.totalorder %s26, 0
      %p46 = por %p44, %p45
      %p47 = scmp.ne.s32.totalorder %s36, %s39
      %p48 = scmp.eq.s32.totalorder %s31, 1
      %p49 = por %p47, %p48
      %p50 = scmp.ne.s32.totalorder %s39, %s40
      %p51 = scmp.eq.s32.totalorder %s31, 0
      %p52 = por %p50, %p51
      %p53 = scmp.ne.s32.totalorder %s39, %s40
      %p54 = scmp.eq.s32.totalorder %s32, 1
      %p55 = por %p53, %p54
      %p57 = scmp.ne.s32.totalorder %s40, %s56
      %p58 = scmp.eq.s32.totalorder %s32, 0
      %p59 = por %p57, %p58
      %s61 = sadd.s32 %s60, 1
      %p64 = scmp.eq.s32.totalorder %s26, 1
      %p65 = scmp.ne.s32.totalorder %s60, %s62
      %p66 = scmp.eq.s32.totalorder %s26, 0
      %p67 = por %p65, %p66
      %p68 = scmp.ne.s32.totalorder %s60, %s62
      %p69 = scmp.eq.s32.totalorder %s31, 1
      %p70 = por %p68, %p69
      %p71 = scmp.ne.s32.totalorder %s62, %s63
      %p72 = scmp.eq.s32.totalorder %s31, 0
      %p73 = por %p71, %p72
      %p74 = scmp.ne.s32.totalorder %s62, %s63
      %p75 = scmp.eq.s32.totalorder %s32, 1
      %p76 = por %p74, %p75
      %p78 = scmp.ne.s32.totalorder %s63, %s77
      %p79 = scmp.eq.s32.totalorder %s32, 0
      %p80 = por %p78, %p79
      %s82 = sadd.s32 %s81, 1
      %p85 = scmp.eq.s32.totalorder %s26, 1
      %p86 = scmp.ne.s32.totalorder %s81, %s83
      %p87 = scmp.eq.s32.totalorder %s26, 0
      %p88 = por %p86, %p87
      %p89 = scmp.ne.s32.totalorder %s81, %s83
      %p90 = scmp.eq.s32.totalorder %s31, 1
      %p91 = por %p89, %p90
      %p92 = scmp.ne.s32.totalorder %s83, %s84
      %p93 = scmp.eq.s32.totalorder %s31, 0
      %p94 = por %p92, %p93
      %p95 = scmp.ne.s32.totalorder %s83, %s84
      %p96 = scmp.eq.s32.totalorder %s32, 1
      %p97 = por %p95, %p96
      %p99 = scmp.ne.s32.totalorder %s84, %s98
      %p100 = scmp.eq.s32.totalorder %s32, 0
      %p101 = por %p99, %p100
      %s103 = sadd.s32 %s102, 1
      %p106 = scmp.eq.s32.totalorder %s26, 1
      %p107 = scmp.ne.s32.totalorder %s102, %s104
      %p108 = scmp.eq.s32.totalorder %s26, 0
      %p109 = por %p107, %p108
      %p110 = scmp.ne.s32.totalorder %s102, %s104
      %p111 = scmp.eq.s32.totalorder %s31, 1
      %p112 = por %p110, %p111
      %p113 = scmp.ne.s32.totalorder %s104, %s105
      %p114 = scmp.eq.s32.totalorder %s31, 0
      %p115 = por %p113, %p114
      %p116 = scmp.ne.s32.totalorder %s104, %s105
      %p117 = scmp.eq.s32.totalorder %s32, 1
      %p118 = por %p116, %p117
      %p120 = scmp.ne.s32.totalorder %s105, %s119
      %p121 = scmp.eq.s32.totalorder %s32, 0
      %p122 = por %p120, %p121
      %s124 = sadd.s32 %s123, 1
      %p127 = scmp.eq.s32.totalorder %s26, 1
      %p128 = scmp.ne.s32.totalorder %s123, %s125
      %p129 = scmp.eq.s32.totalorder %s26, 0
      %p130 = por %p128, %p129
      %p131 = scmp.ne.s32.totalorder %s123, %s125
      %p132 = scmp.eq.s32.totalorder %s31, 1
      %p133 = por %p131, %p132
      %p134 = scmp.ne.s32.totalorder %s125, %s126
      %p135 = scmp.eq.s32.totalorder %s31, 0
      %p136 = por %p134, %p135
      %p137 = scmp.ne.s32.totalorder %s125, %s126
      %p138 = scmp.eq.s32.totalorder %s32, 1
      %p139 = por %p137, %p138
      %p141 = scmp.ne.s32.totalorder %s126, %s140
      %p142 = scmp.eq.s32.totalorder %s32, 0
      %p143 = por %p141, %p142
      %s145 = sadd.s32 %s144, 1
      %p148 = scmp.eq.s32.totalorder %s26, 1
      %p149 = scmp.ne.s32.totalorder %s144, %s146
      %p150 = scmp.eq.s32.totalorder %s26, 0
      %p151 = por %p149, %p150
      %p152 = scmp.ne.s32.totalorder %s144, %s146
      %p153 = scmp.eq.s32.totalorder %s31, 1
      %p154 = por %p152, %p153
      %p155 = scmp.ne.s32.totalorder %s146, %s147
      %p156 = scmp.eq.s32.totalorder %s31, 0
      %p157 = por %p155, %p156
      %p158 = scmp.ne.s32.totalorder %s146, %s147
      %p159 = scmp.eq.s32.totalorder %s32, 1
      %p160 = por %p158, %p159
      %p162 = scmp.ne.s32.totalorder %s147, %s161
      %p163 = scmp.eq.s32.totalorder %s32, 0
      %p164 = por %p162, %p163
      %s166 = sadd.s32 %s165, 1
      %p169 = scmp.eq.s32.totalorder %s26, 1
      %p170 = scmp.ne.s32.totalorder %s165, %s167
      %p171 = scmp.eq.s32.totalorder %s26, 0
      %p172 = por %p170, %p171
      %p173 = scmp.ne.s32.totalorder %s165, %s167
      %p174 = scmp.eq.s32.totalorder %s31, 1
      %p175 = por %p173, %p174
      %p176 = scmp.ne.s32.totalorder %s167, %s168
      %p177 = scmp.eq.s32.totalorder %s31, 0
      %p178 = por %p176, %p177
      %p179 = scmp.ne.s32.totalorder %s167, %s168
      %p180 = scmp.eq.s32.totalorder %s32, 1
      %p181 = por %p179, %p180
      %p183 = scmp.ne.s32.totalorder %s168, %s182
      %p184 = scmp.eq.s32.totalorder %s32, 0
      %p185 = por %p183, %p184
      %s187 = sadd.s32 %s186, 1
      %p190 = scmp.eq.s32.totalorder %s26, 1
      %p191 = scmp.ne.s32.totalorder %s186, %s188
      %p192 = scmp.eq.s32.totalorder %s26, 0
      %p193 = por %p191, %p192
      %p194 = scmp.ne.s32.totalorder %s186, %s188
      %p195 = scmp.eq.s32.totalorder %s31, 1
      %p196 = por %p194, %p195
      %p197 = scmp.ne.s32.totalorder %s188, %s189
      %p198 = scmp.eq.s32.totalorder %s31, 0
      %p199 = por %p197, %p198
      %p200 = scmp.ne.s32.totalorder %s188, %s189
      %p201 = scmp.eq.s32.totalorder %s32, 1
      %p202 = por %p200, %p201
      %p204 = scmp.ne.s32.totalorder %s189, %s203
      %p205 = scmp.eq.s32.totalorder %s32, 0
      %p206 = por %p204, %p205
      %s208 = sadd.s32 %s207, 1
      %p211 = scmp.eq.s32.totalorder %s26, 1
      %p212 = scmp.ne.s32.totalorder %s207, %s209
      %p213 = scmp.eq.s32.totalorder %s26, 0
      %p214 = por %p212, %p213
      %p215 = scmp.ne.s32.totalorder %s207, %s209
      %p216 = scmp.eq.s32.totalorder %s31, 1
      %p217 = por %p215, %p216
      %p218 = scmp.ne.s32.totalorder %s209, %s210
      %p219 = scmp.eq.s32.totalorder %s31, 0
      %p220 = por %p218, %p219
      %p221 = scmp.ne.s32.totalorder %s209, %s210
      %p222 = scmp.eq.s32.totalorder %s32, 1
      %p223 = por %p221, %p222
      %p225 = scmp.ne.s32.totalorder %s210, %s224
      %p226 = scmp.eq.s32.totalorder %s32, 0
      %p227 = por %p225, %p226
      %s229 = sadd.s32 %s228, 1
      %p232 = scmp.eq.s32.totalorder %s26, 1
      %p233 = scmp.ne.s32.totalorder %s228, %s230
      %p234 = scmp.eq.s32.totalorder %s26, 0
      %p235 = por %p233, %p234
      %p236 = scmp.ne.s32.totalorder %s228, %s230
      %p237 = scmp.eq.s32.totalorder %s31, 1
      %p238 = por %p236, %p237
      %p239 = scmp.ne.s32.totalorder %s230, %s231
      %p240 = scmp.eq.s32.totalorder %s31, 0
      %p241 = por %p239, %p240
      %p242 = scmp.ne.s32.totalorder %s230, %s231
      %p243 = scmp.eq.s32.totalorder %s32, 1
      %p244 = por %p242, %p243
      %p246 = scmp.ne.s32.totalorder %s231, %s245
      %p247 = scmp.eq.s32.totalorder %s32, 0
      %p248 = por %p246, %p247
      %s250 = sadd.s32 %s249, 1
      %p253 = scmp.eq.s32.totalorder %s26, 1
      %p254 = scmp.ne.s32.totalorder %s249, %s251
      %p255 = scmp.eq.s32.totalorder %s26, 0
      %p256 = por %p254, %p255
      %p257 = scmp.ne.s32.totalorder %s249, %s251
      %p258 = scmp.eq.s32.totalorder %s31, 1
      %p259 = por %p257, %p258
      %p260 = scmp.ne.s32.totalorder %s251, %s252
      %p261 = scmp.eq.s32.totalorder %s31, 0
      %p262 = por %p260, %p261
      %p263 = scmp.ne.s32.totalorder %s251, %s252
      %p264 = scmp.eq.s32.totalorder %s32, 1
      %p265 = por %p263, %p264
      %p267 = scmp.ne.s32.totalorder %s252, %s266
      %p268 = scmp.eq.s32.totalorder %s32, 0
      %p269 = por %p267, %p268
      %s271 = sadd.s32 %s270, 1
      %p274 = scmp.eq.s32.totalorder %s26, 1
      %p275 = scmp.ne.s32.totalorder %s270, %s272
      %p276 = scmp.eq.s32.totalorder %s26, 0
      %p277 = por %p275, %p276
      %p278 = scmp.ne.s32.totalorder %s270, %s272
      %p279 = scmp.eq.s32.totalorder %s31, 1
      %p280 = por %p278, %p279
      %p281 = scmp.ne.s32.totalorder %s272, %s273
      %p282 = scmp.eq.s32.totalorder %s31, 0
      %p283 = por %p281, %p282
      %p284 = scmp.ne.s32.totalorder %s272, %s273
      %p285 = scmp.eq.s32.totalorder %s32, 1
      %p286 = por %p284, %p285
      %p288 = scmp.ne.s32.totalorder %s273, %s287
      %p289 = scmp.eq.s32.totalorder %s32, 0
      %p290 = por %p288, %p289
      %s292 = sadd.s32 %s291, 1
      %p295 = scmp.eq.s32.totalorder %s26, 1
      %p296 = scmp.ne.s32.totalorder %s291, %s293
      %p297 = scmp.eq.s32.totalorder %s26, 0
      %p298 = por %p296, %p297
      %p299 = scmp.ne.s32.totalorder %s291, %s293
      %p300 = scmp.eq.s32.totalorder %s31, 1
      %p301 = por %p299, %p300
      %p302 = scmp.ne.s32.totalorder %s293, %s294
      %p303 = scmp.eq.s32.totalorder %s31, 0
      %p304 = por %p302, %p303
      %p305 = scmp.ne.s32.totalorder %s293, %s294
      %p306 = scmp.eq.s32.totalorder %s32, 1
      %p307 = por %p305, %p306
      %p309 = scmp.ne.s32.totalorder %s294, %s308
      %p310 = scmp.eq.s32.totalorder %s32, 0
      %p311 = por %p309, %p310
      %s312 = ssub.s32 %s26, %s33
      %p313 = scmp.eq.s32.totalorder %s312, 0
      %s315 = sadd.s32 %s314, 1
      %s316 = scalar_select %p313, %s314, %s315
      %p319 = pneg %p313
      %p320 = scmp.eq.s32.totalorder %s26, 1
      %p321 = por %p319, %p320
      %p322 = scmp.ne.s32.totalorder %s314, %s317
      %p323 = scmp.eq.s32.totalorder %s26, 0
      %p324 = por %p322, %p323
      %p325 = scmp.ne.s32.totalorder %s314, %s317
      %p326 = scmp.eq.s32.totalorder %s31, 1
      %p327 = por %p325, %p326
      %p328 = scmp.ne.s32.totalorder %s317, %s318
      %p329 = scmp.eq.s32.totalorder %s31, 0
      %p330 = por %p328, %p329
      %p331 = scmp.ne.s32.totalorder %s317, %s318
      %p332 = scmp.eq.s32.totalorder %s32, 1
      %p333 = por %p331, %p332
      %p335 = scmp.ne.s32.totalorder %s318, %s334
      %p336 = scmp.eq.s32.totalorder %s32, 0
      %p337 = por %p335, %p336
      %p338 = scmp.le.s32.totalorder 1, %s26
      %p339 = scmp.lt.s32.totalorder %s26, 3
      %p340 = pnand %p338, %p339
      %p341 = pneg %p340
      // Predicated region
      $region9: #{tpu_custom_call.1} parent=5 // pred_check
        _
      $region10: #{tpu_custom_call.1} parent=5 // pred_check_branch
        %343 = sbr.rel (%p340) target = $region12
      $region11: #{tpu_custom_call.1} parent=5 // pred_region
        %s344 = ssub.s32 %s26, 1
        // Predicated region
        $region13: #{tpu_custom_call.1} parent=11 // pred_check
          %p345 = pneg %p73
        $region14: #{tpu_custom_call.1} parent=11 // pred_check_branch
          %347 = sbr.rel (%p345) target = $region16
        $region15: #{tpu_custom_call.1} parent=11 // pred_region
          %s349 = ssub.s32 8192, 8192
          %350 = vsyncadd [#allocation3], %s349
          %s351 = sshll.u32 [#allocation2], 4
          %s352 = int_to_ptr.vmem [resolvable:$true] %s351
          %357 = dma.hbm_to_vmem [thread:$0]  %s1, 8192, %s352, [#allocation3], 128, 128, 8
        $region16: #{tpu_custom_call.1} parent=11 // pred_fallthru
          _
        // Predicated region
        $region17: #{tpu_custom_call.1} parent=11 // pred_check
          %p358 = pneg %p94
        $region18: #{tpu_custom_call.1} parent=11 // pred_check_branch
          %360 = sbr.rel (%p358) target = $region20
        $region19: #{tpu_custom_call.1} parent=11 // pred_region
          _
        $region20: #{tpu_custom_call.1} parent=11 // pred_fallthru
          _
        // Predicated region
        $region21: #{tpu_custom_call.1} parent=11 // pred_check
          %p361 = pneg %p115
        $region22: #{tpu_custom_call.1} parent=11 // pred_check_branch
          %363 = sbr.rel (%p361) target = $region24
        $region23: #{tpu_custom_call.1} parent=11 // pred_region
          _
        $region24: #{tpu_custom_call.1} parent=11 // pred_fallthru
          _
        // Predicated region
        $region25: #{tpu_custom_call.1} parent=11 // pred_check
          %p364 = pneg %p136
        $region26: #{tpu_custom_call.1} parent=11 // pred_check_branch
          %366 = sbr.rel (%p364) target = $region28
        $region27: #{tpu_custom_call.1} parent=11 // pred_region
          %s368 = ssub.s32 16, 16
          %369 = vsyncadd [#allocation6], %s368
          %s371 = sshll.u32 [#allocation5], 4
          %s372 = int_to_ptr.vmem [resolvable:$true] %s371
          %374 = dma.hbm_to_vmem [thread:$0]  %s4, 16, %s372, [#allocation6]
        $region28: #{tpu_custom_call.1} parent=11 // pred_fallthru
          _
        // Predicated region
        $region29: #{tpu_custom_call.1} parent=11 // pred_check
          %p375 = pneg %p157
        $region30: #{tpu_custom_call.1} parent=11 // pred_check_branch
          %377 = sbr.rel (%p375) target = $region32
        $region31: #{tpu_custom_call.1} parent=11 // pred_region
          _
        $region32: #{tpu_custom_call.1} parent=11 // pred_fallthru
          _
        // Predicated region
        $region33: #{tpu_custom_call.1} parent=11 // pred_check
          %p378 = pneg %p178
        $region34: #{tpu_custom_call.1} parent=11 // pred_check_branch
          %380 = sbr.rel (%p378) target = $region36
        $region35: #{tpu_custom_call.1} parent=11 // pred_region
          %s382 = ssub.s32 16, 16
          %383 = vsyncadd [#allocation6], %s382
          %s385 = sshll.u32 [#allocation7], 4
          %s386 = int_to_ptr.vmem [resolvable:$true] %s385
          %388 = dma.hbm_to_vmem [thread:$0]  %s6, 16, %s386, [#allocation6]
        $region36: #{tpu_custom_call.1} parent=11 // pred_fallthru
          _
        // Predicated region
        $region37: #{tpu_custom_call.1} parent=11 // pred_check
          %p389 = pneg %p199
        $region38: #{tpu_custom_call.1} parent=11 // pred_check_branch
          %391 = sbr.rel (%p389) target = $region40
        $region39: #{tpu_custom_call.1} parent=11 // pred_region
          %s393 = ssub.s32 512, 512
          %394 = vsyncadd [#allocation9], %s393
          %s395 = sshll.u32 [#allocation8], 4
          %s396 = int_to_ptr.vmem [resolvable:$true] %s395
          %401 = dma.hbm_to_vmem [thread:$0]  %s7, 512, %s396, [#allocation9], 128, 128, 8
        $region40: #{tpu_custom_call.1} parent=11 // pred_fallthru
          _
        // Predicated region
        $region41: #{tpu_custom_call.1} parent=11 // pred_check
          %p402 = pneg %p220
        $region42: #{tpu_custom_call.1} parent=11 // pred_check_branch
          %404 = sbr.rel (%p402) target = $region44
        $region43: #{tpu_custom_call.1} parent=11 // pred_region
          %s406 = ssub.s32 16, 16
          %407 = vsyncadd [#allocation9], %s406
          %s409 = sshll.u32 [#allocation10], 4
          %s410 = int_to_ptr.vmem [resolvable:$true] %s409
          %412 = dma.hbm_to_vmem [thread:$0]  %s8, 16, %s410, [#allocation9]
        $region44: #{tpu_custom_call.1} parent=11 // pred_fallthru
          _
        // Predicated region
        $region45: #{tpu_custom_call.1} parent=11 // pred_check
          %p413 = pneg %p241
        $region46: #{tpu_custom_call.1} parent=11 // pred_check_branch
          %415 = sbr.rel (%p413) target = $region48
        $region47: #{tpu_custom_call.1} parent=11 // pred_region
          _
        $region48: #{tpu_custom_call.1} parent=11 // pred_fallthru
          _
        // Predicated region
        $region49: #{tpu_custom_call.1} parent=11 // pred_check
          %p416 = pneg %p262
        $region50: #{tpu_custom_call.1} parent=11 // pred_check_branch
          %418 = sbr.rel (%p416) target = $region52
        $region51: #{tpu_custom_call.1} parent=11 // pred_region
          %s420 = ssub.s32 16, 16
          %421 = vsyncadd [#allocation12], %s420
          %s423 = sshll.u32 [#allocation11], 4
          %s424 = int_to_ptr.vmem [resolvable:$true] %s423
          %426 = dma.hbm_to_vmem [thread:$0]  %s10, 16, %s424, [#allocation12]
        $region52: #{tpu_custom_call.1} parent=11 // pred_fallthru
          _
        // Predicated region
        $region53: #{tpu_custom_call.1} parent=11 // pred_check
          %p427 = pneg %p283
        $region54: #{tpu_custom_call.1} parent=11 // pred_check_branch
          %429 = sbr.rel (%p427) target = $region56
        $region55: #{tpu_custom_call.1} parent=11 // pred_region
          %s431 = ssub.s32 8192, 8192
          %432 = vsyncadd [#allocation12], %s431
          %s433 = sshll.u32 [#allocation13], 4
          %s434 = int_to_ptr.vmem [resolvable:$true] %s433
          %439 = dma.hbm_to_vmem [thread:$0]  %s11, 8192, %s434, [#allocation12], 512, 512, 32
        $region56: #{tpu_custom_call.1} parent=11 // pred_fallthru
          _
        // Predicated region
        $region57: #{tpu_custom_call.1} parent=11 // pred_check
          %p440 = pneg %p304
        $region58: #{tpu_custom_call.1} parent=11 // pred_check_branch
          %442 = sbr.rel (%p440) target = $region60
        $region59: #{tpu_custom_call.1} parent=11 // pred_region
          _
        $region60: #{tpu_custom_call.1} parent=11 // pred_fallthru
          _
      $region12: #{tpu_custom_call.1} parent=5 // pred_fallthru
        _
      %p443 = scmp.lt.s32.totalorder %s26, 2
      // Predicated region
      $region61: #{tpu_custom_call.1} parent=5 // pred_check
        %p444 = pneg %p443
      $region62: #{tpu_custom_call.1} parent=5 // pred_check_branch
        %446 = sbr.rel (%p444) target = $region64
      $region63: #{tpu_custom_call.1} parent=5 // pred_region
        // Predicated region
        $region65: #{tpu_custom_call.1} parent=63 // pred_check
          %p447 = pneg %p46
        $region66: #{tpu_custom_call.1} parent=63 // pred_check_branch
          %449 = sbr.rel (%p447) target = $region68
        $region67: #{tpu_custom_call.1} parent=63 // pred_region
          %s450 = smul.u32 4, %s26
          %p451 = scmp.lt.s32.totalorder %s450, 7
          %s452 = scalar_select %p451, %s450, 7
          %s453 = smul.addr %s452, 4
          %s454 = smul.addr %s453, 8
          %s455 = scalar_lea.vmem %s0, %s454
          %s456 = smul.u32 4, %s26
        $region68: #{tpu_custom_call.1} parent=63 // pred_fallthru
          _
      $region64: #{tpu_custom_call.1} parent=5 // pred_fallthru
        _
      %p457 = scmp.le.s32.totalorder 1, %s26
      %p458 = scmp.lt.s32.totalorder %s26, 3
      %p459 = pnand %p457, %p458
      %p460 = pneg %p459
      // Predicated region
      $region69: #{tpu_custom_call.1} parent=5 // pred_check
        _
      $region70: #{tpu_custom_call.1} parent=5 // pred_check_branch
        %462 = sbr.rel (%p459) target = $region72
      $region71: #{tpu_custom_call.1} parent=5 // pred_region
        %s463 = ssub.s32 %s26, 1
        // Predicated region
        $region73: #{tpu_custom_call.1} parent=71 // pred_check
          %p464 = pneg %p73
        $region74: #{tpu_custom_call.1} parent=71 // pred_check_branch
          %466 = sbr.rel (%p464) target = $region76
        $region75: #{tpu_custom_call.1} parent=71 // pred_region
          %467 = dma.done [#allocation3], 8192
        $region76: #{tpu_custom_call.1} parent=71 // pred_fallthru
          _
        // Predicated region
        $region77: #{tpu_custom_call.1} parent=71 // pred_check
          %p468 = pneg %p136
        $region78: #{tpu_custom_call.1} parent=71 // pred_check_branch
          %470 = sbr.rel (%p468) target = $region80
        $region79: #{tpu_custom_call.1} parent=71 // pred_region
          %471 = dma.done [#allocation6], 16
        $region80: #{tpu_custom_call.1} parent=71 // pred_fallthru
          _
        // Predicated region
        $region81: #{tpu_custom_call.1} parent=71 // pred_check
          %p472 = pneg %p178
        $region82: #{tpu_custom_call.1} parent=71 // pred_check_branch
          %474 = sbr.rel (%p472) target = $region84
        $region83: #{tpu_custom_call.1} parent=71 // pred_region
          %475 = dma.done [#allocation6], 16
        $region84: #{tpu_custom_call.1} parent=71 // pred_fallthru
          _
        // Predicated region
        $region85: #{tpu_custom_call.1} parent=71 // pred_check
          %p476 = pneg %p199
        $region86: #{tpu_custom_call.1} parent=71 // pred_check_branch
          %478 = sbr.rel (%p476) target = $region88
        $region87: #{tpu_custom_call.1} parent=71 // pred_region
          %479 = dma.done [#allocation9], 512
        $region88: #{tpu_custom_call.1} parent=71 // pred_fallthru
          _
        // Predicated region
        $region89: #{tpu_custom_call.1} parent=71 // pred_check
          %p480 = pneg %p220
        $region90: #{tpu_custom_call.1} parent=71 // pred_check_branch
          %482 = sbr.rel (%p480) target = $region92
        $region91: #{tpu_custom_call.1} parent=71 // pred_region
          %483 = dma.done [#allocation9], 16
        $region92: #{tpu_custom_call.1} parent=71 // pred_fallthru
          _
        // Predicated region
        $region93: #{tpu_custom_call.1} parent=71 // pred_check
          %p484 = pneg %p262
        $region94: #{tpu_custom_call.1} parent=71 // pred_check_branch
          %486 = sbr.rel (%p484) target = $region96
        $region95: #{tpu_custom_call.1} parent=71 // pred_region
          %487 = dma.done [#allocation12], 16
        $region96: #{tpu_custom_call.1} parent=71 // pred_fallthru
          _
        // Predicated region
        $region97: #{tpu_custom_call.1} parent=71 // pred_check
          %p488 = pneg %p283
        $region98: #{tpu_custom_call.1} parent=71 // pred_check_branch
          %490 = sbr.rel (%p488) target = $region100
        $region99: #{tpu_custom_call.1} parent=71 // pred_region
          %491 = dma.done [#allocation12], 8192
        $region100: #{tpu_custom_call.1} parent=71 // pred_fallthru
          _
        %s492 = smul.u32 4, %s31
        %p493 = scmp.lt.s32.totalorder %s492, 7
        %s494 = scalar_select %p493, %s492, 7
        %s495 = smul.addr %s494, 4
        %s496 = smul.addr %s495, 8
        %s497 = scalar_lea.vmem %s0, %s496
        %p498 = pneg %p52
        %p499 = pneg %p49
        %p500 = pneg %p73
        %p501 = pneg %p70
        %p502 = pneg %p94
        %p503 = pneg %p91
        %p504 = pneg %p115
        %p505 = pneg %p112
        %p506 = pneg %p136
        %p507 = pneg %p133
        %p508 = pneg %p157
        %p509 = pneg %p154
        %p510 = pneg %p178
        %p511 = pneg %p175
        %p512 = pneg %p199
        %p513 = pneg %p196
        %p514 = pneg %p220
        %p515 = pneg %p217
        %p516 = pneg %p241
        %p517 = pneg %p238
        %p518 = pneg %p262
        %p519 = pneg %p259
        %p520 = pneg %p283
        %p521 = pneg %p280
        %p522 = pneg %p304
        %p523 = pneg %p301
        %p524 = pneg %p330
        %p525 = pneg %p327
        %s526 = sand.u32 %s317, 1
        %s527 = scalar_lea.sflag [#allocation4], %s526
        %s528 = sand.u32 %s317, 1
        %s529 = smul.addr %s528, 128
        %s530 = scalar_lea.vmem [#allocation14], %s529
        %s531 = smul.u32 4, %s31
        %p532 = scmp.lt.s32.totalorder %s531, 7
        %s533 = scalar_select %p532, %s531, 7
        %s534 = smul.addr %s533, 4
        %s535 = smul.addr %s534, 8
        %s536 = scalar_lea.vmem %s0, %s535
        %s537 = smul.u32 4, %s31
        %s538 = smul.u32 4, %s31
        %v539 = vld [vmem:[%s536] sm:$0xff]
        %v540 = vld [vmem:[%s536 + $0x8] sm:$0xff]
        %v541 = vld [vmem:[%s536 + $0x10] sm:$0xff]
        %v542 = vld [vmem:[%s536 + $0x18] sm:$0xff]
        %v543 = vld [vmem:[%s536 + $0x20] sm:$0xff]
        %v544 = vld [vmem:[%s536 + $0x28] sm:$0xff]
        %v545 = vld [vmem:[%s536 + $0x30] sm:$0xff]
        %v546 = vld [vmem:[%s536 + $0x38] sm:$0xff]
        %v547 = vld [vmem:[%s536 + $0x40] sm:$0xff]
        %v548 = vld [vmem:[%s536 + $0x48] sm:$0xff]
        %v549 = vld [vmem:[%s536 + $0x50] sm:$0xff]
        %v550 = vld [vmem:[%s536 + $0x58] sm:$0xff]
        %v551 = vld [vmem:[%s536 + $0x60] sm:$0xff]
        %v552 = vld [vmem:[%s536 + $0x68] sm:$0xff]
        %v553 = vld [vmem:[%s536 + $0x70] sm:$0xff]
        %v554 = vld [vmem:[%s536 + $0x78] sm:$0xff]
        %v555 = vld [vmem:[#allocation2] sm:$0xff]
        %v556 = vld [vmem:[#allocation2 + $0x8] sm:$0xff]
        %v557 = vld [vmem:[#allocation2 + $0x10] sm:$0xff]
        %v558 = vld [vmem:[#allocation2 + $0x18] sm:$0xff]
        %v559 = vld [vmem:[#allocation2 + $0x20] sm:$0xff]
        %v560 = vld [vmem:[#allocation2 + $0x28] sm:$0xff]
        %v561 = vld [vmem:[#allocation2 + $0x30] sm:$0xff]
        %v562 = vld [vmem:[#allocation2 + $0x38] sm:$0xff]
        %v563 = vld [vmem:[#allocation2 + $0x40] sm:$0xff]
        %v564 = vld [vmem:[#allocation2 + $0x48] sm:$0xff]
        %v565 = vld [vmem:[#allocation2 + $0x50] sm:$0xff]
        %v566 = vld [vmem:[#allocation2 + $0x58] sm:$0xff]
        %v567 = vld [vmem:[#allocation2 + $0x60] sm:$0xff]
        %v568 = vld [vmem:[#allocation2 + $0x68] sm:$0xff]
        %v569 = vld [vmem:[#allocation2 + $0x70] sm:$0xff]
        %v570 = vld [vmem:[#allocation2 + $0x78] sm:$0xff]
        %v571 = vld [vmem:[#allocation2 + $0x80] sm:$0xff]
        %v572 = vld [vmem:[#allocation2 + $0x88] sm:$0xff]
        %v573 = vld [vmem:[#allocation2 + $0x90] sm:$0xff]
        %v574 = vld [vmem:[#allocation2 + $0x98] sm:$0xff]
        %v575 = vld [vmem:[#allocation2 + $0xa0] sm:$0xff]
        %v576 = vld [vmem:[#allocation2 + $0xa8] sm:$0xff]
        %v577 = vld [vmem:[#allocation2 + $0xb0] sm:$0xff]
        %v578 = vld [vmem:[#allocation2 + $0xb8] sm:$0xff]
        %v579 = vld [vmem:[#allocation2 + $0xc0] sm:$0xff]
        %v580 = vld [vmem:[#allocation2 + $0xc8] sm:$0xff]
        %v581 = vld [vmem:[#allocation2 + $0xd0] sm:$0xff]
        %v582 = vld [vmem:[#allocation2 + $0xd8] sm:$0xff]
        %v583 = vld [vmem:[#allocation2 + $0xe0] sm:$0xff]
        %v584 = vld [vmem:[#allocation2 + $0xe8] sm:$0xff]
        %v585 = vld [vmem:[#allocation2 + $0xf0] sm:$0xff]
        %v586 = vld [vmem:[#allocation2 + $0xf8] sm:$0xff]
        %v587 = vld [vmem:[#allocation2 + $0x100] sm:$0xff]
        %v588 = vld [vmem:[#allocation2 + $0x108] sm:$0xff]
        %v589 = vld [vmem:[#allocation2 + $0x110] sm:$0xff]
        %v590 = vld [vmem:[#allocation2 + $0x118] sm:$0xff]
        %v591 = vld [vmem:[#allocation2 + $0x120] sm:$0xff]
        %v592 = vld [vmem:[#allocation2 + $0x128] sm:$0xff]
        %v593 = vld [vmem:[#allocation2 + $0x130] sm:$0xff]
        %v594 = vld [vmem:[#allocation2 + $0x138] sm:$0xff]
        %v595 = vld [vmem:[#allocation2 + $0x140] sm:$0xff]
        %v596 = vld [vmem:[#allocation2 + $0x148] sm:$0xff]
        %v597 = vld [vmem:[#allocation2 + $0x150] sm:$0xff]
        %v598 = vld [vmem:[#allocation2 + $0x158] sm:$0xff]
        %v599 = vld [vmem:[#allocation2 + $0x160] sm:$0xff]
        %v600 = vld [vmem:[#allocation2 + $0x168] sm:$0xff]
        %v601 = vld [vmem:[#allocation2 + $0x170] sm:$0xff]
        %v602 = vld [vmem:[#allocation2 + $0x178] sm:$0xff]
        %v603 = vld [vmem:[#allocation2 + $0x180] sm:$0xff]
        %v604 = vld [vmem:[#allocation2 + $0x188] sm:$0xff]
        %v605 = vld [vmem:[#allocation2 + $0x190] sm:$0xff]
        %v606 = vld [vmem:[#allocation2 + $0x198] sm:$0xff]
        %v607 = vld [vmem:[#allocation2 + $0x1a0] sm:$0xff]
        %v608 = vld [vmem:[#allocation2 + $0x1a8] sm:$0xff]
        %v609 = vld [vmem:[#allocation2 + $0x1b0] sm:$0xff]
        %v610 = vld [vmem:[#allocation2 + $0x1b8] sm:$0xff]
        %v611 = vld [vmem:[#allocation2 + $0x1c0] sm:$0xff]
        %v612 = vld [vmem:[#allocation2 + $0x1c8] sm:$0xff]
        %v613 = vld [vmem:[#allocation2 + $0x1d0] sm:$0xff]
        %v614 = vld [vmem:[#allocation2 + $0x1d8] sm:$0xff]
        %v615 = vld [vmem:[#allocation2 + $0x1e0] sm:$0xff]
        %v616 = vld [vmem:[#allocation2 + $0x1e8] sm:$0xff]
        %v617 = vld [vmem:[#allocation2 + $0x1f0] sm:$0xff]
        %v618 = vld [vmem:[#allocation2 + $0x1f8] sm:$0xff]
        %v619 = vld [vmem:[%s2] sm:$0x1]
        %v621 = vlaneseq
        %v622 = vshrl.u32 %v621, 7
        %v623 = vsub.s32 0, %v622
        %v624 = vrot.slane %v619, %v623
        %626 = vmatprep.subr.mxu0 0.0
        %627 = vmatpush1.msra.mxu0 %v555
        %628 = vmatprep.subr.mxu0 0.0
        %629 = vmatpush1.msra.mxu0 %v556
        %630 = vmatprep.subr.mxu0 0.0
        %631 = vmatpush1.msra.mxu0 %v557
        %632 = vmatprep.subr.mxu0 0.0
        %633 = vmatpush1.msra.mxu0 %v558
        %634 = vmatprep.subr.mxu0 0.0
        %635 = vmatpush1.msra.mxu0 %v559
        %636 = vmatprep.subr.mxu0 0.0
        %637 = vmatpush1.msra.mxu0 %v560
        %638 = vmatprep.subr.mxu0 0.0
        %639 = vmatpush1.msra.mxu0 %v561
        %640 = vmatprep.subr.mxu0 0.0
        %641 = vmatpush1.msra.mxu0 %v562
        %642 = vmatprep.subr.mxu0 0.0
        %643 = vmatpush1.msra.mxu0 %v563
        %644 = vmatprep.subr.mxu0 0.0
        %645 = vmatpush1.msra.mxu0 %v564
        %646 = vmatprep.subr.mxu0 0.0
        %647 = vmatpush1.msra.mxu0 %v565
        %648 = vmatprep.subr.mxu0 0.0
        %649 = vmatpush1.msra.mxu0 %v566
        %650 = vmatprep.subr.mxu0 0.0
        %651 = vmatpush1.msra.mxu0 %v567
        %652 = vmatprep.subr.mxu0 0.0
        %653 = vmatpush1.msra.mxu0 %v568
        %654 = vmatprep.subr.mxu0 0.0
        %655 = vmatpush1.msra.mxu0 %v569
        %656 = vmatprep.subr.mxu0 0.0
        %657 = vmatpush1.msra.mxu0 %v570
        %658 = vmatprep.subr.mxu0 0.0
        %659 = vmatpush1.msra.mxu0 %v571
        %660 = vmatprep.subr.mxu0 0.0
        %661 = vmatpush1.msra.mxu0 %v572
        %662 = vmatprep.subr.mxu0 0.0
        %663 = vmatpush1.msra.mxu0 %v573
        %664 = vmatprep.subr.mxu0 0.0
        %665 = vmatpush1.msra.mxu0 %v574
        %666 = vmatprep.subr.mxu0 0.0
        %667 = vmatpush1.msra.mxu0 %v575
        %668 = vmatprep.subr.mxu0 0.0
        %669 = vmatpush1.msra.mxu0 %v576
        %670 = vmatprep.subr.mxu0 0.0
        %671 = vmatpush1.msra.mxu0 %v577
        %672 = vmatprep.subr.mxu0 0.0
        %673 = vmatpush1.msra.mxu0 %v578
        %674 = vmatprep.subr.mxu0 0.0
        %675 = vmatpush1.msra.mxu0 %v579
        %676 = vmatprep.subr.mxu0 0.0
        %677 = vmatpush1.msra.mxu0 %v580
        %678 = vmatprep.subr.mxu0 0.0
        %679 = vmatpush1.msra.mxu0 %v581
        %680 = vmatprep.subr.mxu0 0.0
        %681 = vmatpush1.msra.mxu0 %v582
        %682 = vmatprep.subr.mxu0 0.0
        %683 = vmatpush1.msra.mxu0 %v583
        %684 = vmatprep.subr.mxu0 0.0
        %685 = vmatpush1.msra.mxu0 %v584
        %686 = vmatprep.subr.mxu0 0.0
        %687 = vmatpush1.msra.mxu0 %v585
        %688 = vmatprep.subr.mxu0 0.0
        %689 = vmatpush1.msra.mxu0 %v586
        %690 = vmatprep.mubr.f32.mxu0 %v540
        %691 = vmatmul.mubr.f32.gmra.mrb[0].mxu0 %v539
        %v692 = vpop.f32.mrb[0].mxu0
        %v693 = vadd.f32 %v624, %v692
        %v694 = vpop.f32.mrb[0].mxu0
        %695 = vmatprep.mubr.f32.mxu0 %v544
        %696 = vmatmul.mubr.f32.gmra.mrb[0].mxu0 %v543
        %v697 = vpop.f32.mrb[0].mxu0
        %v698 = vadd.f32 %v624, %v697
        %v699 = vpop.f32.mrb[0].mxu0
        %700 = vmatprep.mubr.f32.mxu0 %v548
        %701 = vmatmul.mubr.f32.gmra.mrb[0].mxu0 %v547
        %v702 = vpop.f32.mrb[0].mxu0
        %v703 = vadd.f32 %v624, %v702
        %v704 = vpop.f32.mrb[0].mxu0
        %705 = vmatprep.mubr.f32.mxu0 %v552
        %706 = vmatmul.mubr.f32.gmra.mrb[0].mxu0 %v551
        %v707 = vpop.f32.mrb[0].mxu0
        %v708 = vadd.f32 %v624, %v707
        %v709 = vpop.f32.mrb[0].mxu0
        %710 = vdwg.mxu0
        %711 = vmatprep.subr.mxu0 0.0
        %712 = vmatpush1.msra.mxu0 %v587
        %713 = vmatprep.subr.mxu0 0.0
        %714 = vmatpush1.msra.mxu0 %v588
        %715 = vmatprep.subr.mxu0 0.0
        %716 = vmatpush1.msra.mxu0 %v589
        %717 = vmatprep.subr.mxu0 0.0
        %718 = vmatpush1.msra.mxu0 %v590
        %719 = vmatprep.subr.mxu0 0.0
        %720 = vmatpush1.msra.mxu0 %v591
        %721 = vmatprep.subr.mxu0 0.0
        %722 = vmatpush1.msra.mxu0 %v592
        %723 = vmatprep.subr.mxu0 0.0
        %724 = vmatpush1.msra.mxu0 %v593
        %725 = vmatprep.subr.mxu0 0.0
        %726 = vmatpush1.msra.mxu0 %v594
        %727 = vmatprep.subr.mxu0 0.0
        %728 = vmatpush1.msra.mxu0 %v595
        %729 = vmatprep.subr.mxu0 0.0
        %730 = vmatpush1.msra.mxu0 %v596
        %731 = vmatprep.subr.mxu0 0.0
        %732 = vmatpush1.msra.mxu0 %v597
        %733 = vmatprep.subr.mxu0 0.0
        %734 = vmatpush1.msra.mxu0 %v598
        %735 = vmatprep.subr.mxu0 0.0
        %736 = vmatpush1.msra.mxu0 %v599
        %737 = vmatprep.subr.mxu0 0.0
        %738 = vmatpush1.msra.mxu0 %v600
        %739 = vmatprep.subr.mxu0 0.0
        %740 = vmatpush1.msra.mxu0 %v601
        %741 = vmatprep.subr.mxu0 0.0
        %742 = vmatpush1.msra.mxu0 %v602
        %743 = vmatprep.subr.mxu0 0.0
        %744 = vmatpush1.msra.mxu0 %v603
        %745 = vmatprep.subr.mxu0 0.0
        %746 = vmatpush1.msra.mxu0 %v604
        %747 = vmatprep.subr.mxu0 0.0
        %748 = vmatpush1.msra.mxu0 %v605
        %749 = vmatprep.subr.mxu0 0.0
        %750 = vmatpush1.msra.mxu0 %v606
        %751 = vmatprep.subr.mxu0 0.0
        %752 = vmatpush1.msra.mxu0 %v607
        %753 = vmatprep.subr.mxu0 0.0
        %754 = vmatpush1.msra.mxu0 %v608
        %755 = vmatprep.subr.mxu0 0.0
        %756 = vmatpush1.msra.mxu0 %v609
        %757 = vmatprep.subr.mxu0 0.0
        %758 = vmatpush1.msra.mxu0 %v610
        %759 = vmatprep.subr.mxu0 0.0
        %760 = vmatpush1.msra.mxu0 %v611
        %761 = vmatprep.subr.mxu0 0.0
        %762 = vmatpush1.msra.mxu0 %v612
        %763 = vmatprep.subr.mxu0 0.0
        %764 = vmatpush1.msra.mxu0 %v613
        %765 = vmatprep.subr.mxu0 0.0
        %766 = vmatpush1.msra.mxu0 %v614
        %767 = vmatprep.subr.mxu0 0.0
        %768 = vmatpush1.msra.mxu0 %v615
        %769 = vmatprep.subr.mxu0 0.0
        %770 = vmatpush1.msra.mxu0 %v616
        %771 = vmatprep.subr.mxu0 0.0
        %772 = vmatpush1.msra.mxu0 %v617
        %773 = vmatprep.subr.mxu0 0.0
        %774 = vmatpush1.msra.mxu0 %v618
        %775 = vmatprep.mubr.f32.mxu0 %v542
        %776 = vmatmul.mubr.f32.gmra.mrb[0].mxu0 %v541
        %v777 = vpop.f32.mrb[0].mxu0
        %v778 = vadd.f32 %v693, %v777
        %v779 = vpop.f32.mrb[0].mxu0
        %780 = vmatprep.mubr.f32.mxu0 %v546
        %781 = vmatmul.mubr.f32.gmra.mrb[0].mxu0 %v545
        %v782 = vpop.f32.mrb[0].mxu0
        %v783 = vadd.f32 %v698, %v782
        %v784 = vpop.f32.mrb[0].mxu0
        %785 = vmatprep.mubr.f32.mxu0 %v550
        %786 = vmatmul.mubr.f32.gmra.mrb[0].mxu0 %v549
        %v787 = vpop.f32.mrb[0].mxu0
        %v788 = vadd.f32 %v703, %v787
        %v789 = vpop.f32.mrb[0].mxu0
        %790 = vmatprep.mubr.f32.mxu0 %v554
        %791 = vmatmul.mubr.f32.gmra.mrb[0].mxu0 %v553
        %v792 = vpop.f32.mrb[0].mxu0
        %v793 = vadd.f32 %v708, %v792
        %v794 = vpop.f32.mrb[0].mxu0
        %795 = vdwg.mxu0
        %v796 = vmax.f32 %v778, 0.0
        %v797 = vmax.f32 %v783, 0.0
        %v798 = vmax.f32 %v788, 0.0
        %v799 = vmax.f32 %v793, 0.0
        %v800 = vld [vmem:[%s3] sm:$0xff]
        %v801 = vld [vmem:[%s3 + $0x8] sm:$0xff]
        %v802 = vld [vmem:[%s3 + $0x10] sm:$0xff]
        %v803 = vld [vmem:[%s3 + $0x18] sm:$0xff]
        %v804 = vld [vmem:[%s3 + $0x20] sm:$0xff]
        %v805 = vld [vmem:[%s3 + $0x28] sm:$0xff]
        %v806 = vld [vmem:[%s3 + $0x30] sm:$0xff]
        %v807 = vld [vmem:[%s3 + $0x38] sm:$0xff]
        %v808 = vld [vmem:[%s3 + $0x40] sm:$0xff]
        %v809 = vld [vmem:[%s3 + $0x48] sm:$0xff]
        %v810 = vld [vmem:[%s3 + $0x50] sm:$0xff]
        %v811 = vld [vmem:[%s3 + $0x58] sm:$0xff]
        %v812 = vld [vmem:[%s3 + $0x60] sm:$0xff]
        %v813 = vld [vmem:[%s3 + $0x68] sm:$0xff]
        %v814 = vld [vmem:[%s3 + $0x70] sm:$0xff]
        %v815 = vld [vmem:[%s3 + $0x78] sm:$0xff]
        %v816 = vld [vmem:[#allocation5] sm:$0x1]
        %v818 = vlaneseq
        %v819 = vshrl.u32 %v818, 7
        %v820 = vsub.s32 0, %v819
        %v821 = vrot.slane %v816, %v820
        %823 = vmatprep.subr.mxu0 0.0
        %824 = vmatpush1.msra.mxu0 %v800
        %825 = vmatprep.subr.mxu0 0.0
        %826 = vmatpush1.msra.mxu0 %v801
        %827 = vmatprep.subr.mxu0 0.0
        %828 = vmatpush1.msra.mxu0 %v802
        %829 = vmatprep.subr.mxu0 0.0
        %830 = vmatpush1.msra.mxu0 %v803
        %831 = vmatprep.subr.mxu0 0.0
        %832 = vmatpush1.msra.mxu0 %v804
        %833 = vmatprep.subr.mxu0 0.0
        %834 = vmatpush1.msra.mxu0 %v805
        %835 = vmatprep.subr.mxu0 0.0
        %836 = vmatpush1.msra.mxu0 %v806
        %837 = vmatprep.subr.mxu0 0.0
        %838 = vmatpush1.msra.mxu0 %v807
        %839 = vmatprep.subr.mxu0 0.0
        %840 = vmatpush1.msra.mxu0 %v808
        %841 = vmatprep.subr.mxu0 0.0
        %842 = vmatpush1.msra.mxu0 %v809
        %843 = vmatprep.subr.mxu0 0.0
        %844 = vmatpush1.msra.mxu0 %v810
        %845 = vmatprep.subr.mxu0 0.0
        %846 = vmatpush1.msra.mxu0 %v811
        %847 = vmatprep.subr.mxu0 0.0
        %848 = vmatpush1.msra.mxu0 %v812
        %849 = vmatprep.subr.mxu0 0.0
        %850 = vmatpush1.msra.mxu0 %v813
        %851 = vmatprep.subr.mxu0 0.0
        %852 = vmatpush1.msra.mxu0 %v814
        %853 = vmatprep.subr.mxu0 0.0
        %854 = vmatpush1.msra.mxu0 %v815
        %855 = vmatprep.subr.mxu0 0.0
        %856 = vmatpush1.msra.mxu0 0.0
        %857 = vmatprep.subr.mxu0 0.0
        %858 = vmatpush1.msra.mxu0 0.0
        %859 = vmatprep.subr.mxu0 0.0
        %860 = vmatpush1.msra.mxu0 0.0
        %861 = vmatprep.subr.mxu0 0.0
        %862 = vmatpush1.msra.mxu0 0.0
        %863 = vmatprep.subr.mxu0 0.0
        %864 = vmatpush1.msra.mxu0 0.0
        %865 = vmatprep.subr.mxu0 0.0
        %866 = vmatpush1.msra.mxu0 0.0
        %867 = vmatprep.subr.mxu0 0.0
        %868 = vmatpush1.msra.mxu0 0.0
        %869 = vmatprep.subr.mxu0 0.0
        %870 = vmatpush1.msra.mxu0 0.0
        %871 = vmatprep.subr.mxu0 0.0
        %872 = vmatpush1.msra.mxu0 0.0
        %873 = vmatprep.subr.mxu0 0.0
        %874 = vmatpush1.msra.mxu0 0.0
        %875 = vmatprep.subr.mxu0 0.0
        %876 = vmatpush1.msra.mxu0 0.0
        %877 = vmatprep.subr.mxu0 0.0
        %878 = vmatpush1.msra.mxu0 0.0
        %879 = vmatprep.subr.mxu0 0.0
        %880 = vmatpush1.msra.mxu0 0.0
        %881 = vmatprep.subr.mxu0 0.0
        %882 = vmatpush1.msra.mxu0 0.0
        %883 = vmatprep.subr.mxu0 0.0
        %884 = vmatpush1.msra.mxu0 0.0
        %885 = vmatprep.subr.mxu0 0.0
        %886 = vmatpush1.msra.mxu0 0.0
        %887 = vmatprep.mubr.f32.mxu0 0.0
        %888 = vmatmul.mubr.f32.gmra.mrb[0].mxu0 %v796
        %v889 = vpop.f32.mrb[0].mxu0
        %v890 = vadd.f32 %v821, %v889
        %v891 = vpop.f32.mrb[0].mxu0
        %892 = vmatprep.mubr.f32.mxu0 0.0
        %893 = vmatmul.mubr.f32.gmra.mrb[0].mxu0 %v797
        %v894 = vpop.f32.mrb[0].mxu0
        %v895 = vadd.f32 %v821, %v894
        %v896 = vpop.f32.mrb[0].mxu0
        %897 = vmatprep.mubr.f32.mxu0 0.0
        %898 = vmatmul.mubr.f32.gmra.mrb[0].mxu0 %v798
        %v899 = vpop.f32.mrb[0].mxu0
        %v900 = vadd.f32 %v821, %v899
        %v901 = vpop.f32.mrb[0].mxu0
        %902 = vmatprep.mubr.f32.mxu0 0.0
        %903 = vmatmul.mubr.f32.gmra.mrb[0].mxu0 %v799
        %v904 = vpop.f32.mrb[0].mxu0
        %v905 = vadd.f32 %v821, %v904
        %v906 = vpop.f32.mrb[0].mxu0
        %907 = vdwg.mxu0
        %v908 = vmax.f32 %v890, 0.0
        %v909 = vmax.f32 %v895, 0.0
        %v910 = vmax.f32 %v900, 0.0
        %v911 = vmax.f32 %v905, 0.0
        %v912 = vld [vmem:[%s5] sm:$0xff]
        %v913 = vld [vmem:[%s5 + $0x8] sm:$0xff]
        %v914 = vld [vmem:[%s5 + $0x10] sm:$0xff]
        %v915 = vld [vmem:[%s5 + $0x18] sm:$0xff]
        %v916 = vld [vmem:[%s5 + $0x20] sm:$0xff]
        %v917 = vld [vmem:[%s5 + $0x28] sm:$0xff]
        %v918 = vld [vmem:[%s5 + $0x30] sm:$0xff]
        %v919 = vld [vmem:[%s5 + $0x38] sm:$0xff]
        %v920 = vld [vmem:[#allocation7] sm:$0x1]
        %v922 = vlaneseq
        %v923 = vshrl.u32 %v922, 7
        %v924 = vsub.s32 0, %v923
        %v925 = vrot.slane %v920, %v924
        %vm927 = vcmask 523264
        %v929 = vsel %vm927, %v908, 0
        %v932 = vsel %vm927, %v909, 0
        %v935 = vsel %vm927, %v910, 0
        %v938 = vsel %vm927, %v911, 0
        %940 = vmatprep.subr.mxu0 0.0
        %941 = vmatpush1.msra.mxu0 %v912
        %942 = vmatprep.subr.mxu0 0.0
        %943 = vmatpush1.msra.mxu0 %v913
        %944 = vmatprep.subr.mxu0 0.0
        %945 = vmatpush1.msra.mxu0 %v914
        %946 = vmatprep.subr.mxu0 0.0
        %947 = vmatpush1.msra.mxu0 %v915
        %948 = vmatprep.subr.mxu0 0.0
        %949 = vmatpush1.msra.mxu0 %v916
        %950 = vmatprep.subr.mxu0 0.0
        %951 = vmatpush1.msra.mxu0 %v917
        %952 = vmatprep.subr.mxu0 0.0
        %953 = vmatpush1.msra.mxu0 %v918
        %954 = vmatprep.subr.mxu0 0.0
        %955 = vmatpush1.msra.mxu0 %v919
        %956 = vmatprep.subr.mxu0 0.0
        %957 = vmatpush1.msra.mxu0 0.0
        %958 = vmatprep.subr.mxu0 0.0
        %959 = vmatpush1.msra.mxu0 0.0
        %960 = vmatprep.subr.mxu0 0.0
        %961 = vmatpush1.msra.mxu0 0.0
        %962 = vmatprep.subr.mxu0 0.0
        %963 = vmatpush1.msra.mxu0 0.0
        %964 = vmatprep.subr.mxu0 0.0
        %965 = vmatpush1.msra.mxu0 0.0
        %966 = vmatprep.subr.mxu0 0.0
        %967 = vmatpush1.msra.mxu0 0.0
        %968 = vmatprep.subr.mxu0 0.0
        %969 = vmatpush1.msra.mxu0 0.0
        %970 = vmatprep.subr.mxu0 0.0
        %971 = vmatpush1.msra.mxu0 0.0
        %972 = vmatprep.subr.mxu0 0.0
        %973 = vmatpush1.msra.mxu0 0.0
        %974 = vmatprep.subr.mxu0 0.0
        %975 = vmatpush1.msra.mxu0 0.0
        %976 = vmatprep.subr.mxu0 0.0
        %977 = vmatpush1.msra.mxu0 0.0
        %978 = vmatprep.subr.mxu0 0.0
        %979 = vmatpush1.msra.mxu0 0.0
        %980 = vmatprep.subr.mxu0 0.0
        %981 = vmatpush1.msra.mxu0 0.0
        %982 = vmatprep.subr.mxu0 0.0
        %983 = vmatpush1.msra.mxu0 0.0
        %984 = vmatprep.subr.mxu0 0.0
        %985 = vmatpush1.msra.mxu0 0.0
        %986 = vmatprep.subr.mxu0 0.0
        %987 = vmatpush1.msra.mxu0 0.0
        %988 = vmatprep.subr.mxu0 0.0
        %989 = vmatpush1.msra.mxu0 0.0
        %990 = vmatprep.subr.mxu0 0.0
        %991 = vmatpush1.msra.mxu0 0.0
        %992 = vmatprep.subr.mxu0 0.0
        %993 = vmatpush1.msra.mxu0 0.0
        %994 = vmatprep.subr.mxu0 0.0
        %995 = vmatpush1.msra.mxu0 0.0
        %996 = vmatprep.subr.mxu0 0.0
        %997 = vmatpush1.msra.mxu0 0.0
        %998 = vmatprep.subr.mxu0 0.0
        %999 = vmatpush1.msra.mxu0 0.0
        %1000 = vmatprep.subr.mxu0 0.0
        %1001 = vmatpush1.msra.mxu0 0.0
        %1002 = vmatprep.subr.mxu0 0.0
        %1003 = vmatpush1.msra.mxu0 0.0
        %1004 = vmatprep.mubr.f32.mxu0 0.0
        %1005 = vmatmul.mubr.f32.gmra.mrb[0].mxu0 %v929
        %v1006 = vpop.f32.mrb[0].mxu0
        %v1007 = vadd.f32 %v925, %v1006
        %v1008 = vpop.f32.mrb[0].mxu0
        %1009 = vmatprep.mubr.f32.mxu0 0.0
        %1010 = vmatmul.mubr.f32.gmra.mrb[0].mxu0 %v932
        %v1011 = vpop.f32.mrb[0].mxu0
        %v1012 = vadd.f32 %v925, %v1011
        %v1013 = vpop.f32.mrb[0].mxu0
        %1014 = vmatprep.mubr.f32.mxu0 0.0
        %1015 = vmatmul.mubr.f32.gmra.mrb[0].mxu0 %v935
        %v1016 = vpop.f32.mrb[0].mxu0
        %v1017 = vadd.f32 %v925, %v1016
        %v1018 = vpop.f32.mrb[0].mxu0
        %1019 = vmatprep.mubr.f32.mxu0 0.0
        %1020 = vmatmul.mubr.f32.gmra.mrb[0].mxu0 %v938
        %v1021 = vpop.f32.mrb[0].mxu0
        %v1022 = vadd.f32 %v925, %v1021
        %v1023 = vpop.f32.mrb[0].mxu0
        %1024 = vdwg.mxu0
        %v1025 = vld [vmem:[#allocation8] sm:$0xff]
        %v1026 = vld [vmem:[#allocation8 + $0x8] sm:$0xff]
        %v1027 = vld [vmem:[#allocation8 + $0x10] sm:$0xff]
        %v1028 = vld [vmem:[#allocation8 + $0x18] sm:$0xff]
        %v1029 = vld [vmem:[#allocation10] sm:$0x1]
        %v1031 = vlaneseq
        %v1032 = vshrl.u32 %v1031, 7
        %v1033 = vsub.s32 0, %v1032
        %v1034 = vrot.slane %v1029, %v1033
        %vm1036 = vcmask 261120
        %v1038 = vsel %vm1036, %v1007, 0
        %v1041 = vsel %vm1036, %v1012, 0
        %v1044 = vsel %vm1036, %v1017, 0
        %v1047 = vsel %vm1036, %v1022, 0
        %1049 = vmatprep.subr.mxu0 0.0
        %1050 = vmatpush1.msra.mxu0 %v1025
        %1051 = vmatprep.subr.mxu0 0.0
        %1052 = vmatpush1.msra.mxu0 %v1026
        %1053 = vmatprep.subr.mxu0 0.0
        %1054 = vmatpush1.msra.mxu0 %v1027
        %1055 = vmatprep.subr.mxu0 0.0
        %1056 = vmatpush1.msra.mxu0 %v1028
        %1057 = vmatprep.subr.mxu0 0.0
        %1058 = vmatpush1.msra.mxu0 0.0
        %1059 = vmatprep.subr.mxu0 0.0
        %1060 = vmatpush1.msra.mxu0 0.0
        %1061 = vmatprep.subr.mxu0 0.0
        %1062 = vmatpush1.msra.mxu0 0.0
        %1063 = vmatprep.subr.mxu0 0.0
        %1064 = vmatpush1.msra.mxu0 0.0
        %1065 = vmatprep.subr.mxu0 0.0
        %1066 = vmatpush1.msra.mxu0 0.0
        %1067 = vmatprep.subr.mxu0 0.0
        %1068 = vmatpush1.msra.mxu0 0.0
        %1069 = vmatprep.subr.mxu0 0.0
        %1070 = vmatpush1.msra.mxu0 0.0
        %1071 = vmatprep.subr.mxu0 0.0
        %1072 = vmatpush1.msra.mxu0 0.0
        %1073 = vmatprep.subr.mxu0 0.0
        %1074 = vmatpush1.msra.mxu0 0.0
        %1075 = vmatprep.subr.mxu0 0.0
        %1076 = vmatpush1.msra.mxu0 0.0
        %1077 = vmatprep.subr.mxu0 0.0
        %1078 = vmatpush1.msra.mxu0 0.0
        %1079 = vmatprep.subr.mxu0 0.0
        %1080 = vmatpush1.msra.mxu0 0.0
        %1081 = vmatprep.subr.mxu0 0.0
        %1082 = vmatpush1.msra.mxu0 0.0
        %1083 = vmatprep.subr.mxu0 0.0
        %1084 = vmatpush1.msra.mxu0 0.0
        %1085 = vmatprep.subr.mxu0 0.0
        %1086 = vmatpush1.msra.mxu0 0.0
        %1087 = vmatprep.subr.mxu0 0.0
        %1088 = vmatpush1.msra.mxu0 0.0
        %1089 = vmatprep.subr.mxu0 0.0
        %1090 = vmatpush1.msra.mxu0 0.0
        %1091 = vmatprep.subr.mxu0 0.0
        %1092 = vmatpush1.msra.mxu0 0.0
        %1093 = vmatprep.subr.mxu0 0.0
        %1094 = vmatpush1.msra.mxu0 0.0
        %1095 = vmatprep.subr.mxu0 0.0
        %1096 = vmatpush1.msra.mxu0 0.0
        %1097 = vmatprep.subr.mxu0 0.0
        %1098 = vmatpush1.msra.mxu0 0.0
        %1099 = vmatprep.subr.mxu0 0.0
        %1100 = vmatpush1.msra.mxu0 0.0
        %1101 = vmatprep.subr.mxu0 0.0
        %1102 = vmatpush1.msra.mxu0 0.0
        %1103 = vmatprep.subr.mxu0 0.0
        %1104 = vmatpush1.msra.mxu0 0.0
        %1105 = vmatprep.subr.mxu0 0.0
        %1106 = vmatpush1.msra.mxu0 0.0
        %1107 = vmatprep.subr.mxu0 0.0
        %1108 = vmatpush1.msra.mxu0 0.0
        %1109 = vmatprep.subr.mxu0 0.0
        %1110 = vmatpush1.msra.mxu0 0.0
        %1111 = vmatprep.subr.mxu0 0.0
        %1112 = vmatpush1.msra.mxu0 0.0
        %1113 = vmatprep.mubr.f32.mxu0 0.0
        %1114 = vmatmul.mubr.f32.gmra.mrb[0].mxu0 %v1038
        %v1115 = vpop.f32.mrb[0].mxu0
        %v1116 = vadd.f32 %v1034, %v1115
        %v1117 = vpop.f32.mrb[0].mxu0
        %1118 = vmatprep.mubr.f32.mxu0 0.0
        %1119 = vmatmul.mubr.f32.gmra.mrb[0].mxu0 %v1041
        %v1120 = vpop.f32.mrb[0].mxu0
        %v1121 = vadd.f32 %v1034, %v1120
        %v1122 = vpop.f32.mrb[0].mxu0
        %1123 = vmatprep.mubr.f32.mxu0 0.0
        %1124 = vmatmul.mubr.f32.gmra.mrb[0].mxu0 %v1044
        %v1125 = vpop.f32.mrb[0].mxu0
        %v1126 = vadd.f32 %v1034, %v1125
        %v1127 = vpop.f32.mrb[0].mxu0
        %1128 = vmatprep.mubr.f32.mxu0 0.0
        %1129 = vmatmul.mubr.f32.gmra.mrb[0].mxu0 %v1047
        %v1130 = vpop.f32.mrb[0].mxu0
        %v1131 = vadd.f32 %v1034, %v1130
        %v1132 = vpop.f32.mrb[0].mxu0
        %1133 = vdwg.mxu0
        %v1134 = vmax.f32 %v1116, 0.0
        %v1135 = vmax.f32 %v1121, 0.0
        %v1136 = vmax.f32 %v1126, 0.0
        %v1137 = vmax.f32 %v1131, 0.0
        %v1138 = vld [vmem:[%s9] sm:$0xff]
        %v1139 = vld [vmem:[%s9 + $0x8] sm:$0xff]
        %v1140 = vld [vmem:[%s9 + $0x10] sm:$0xff]
        %v1141 = vld [vmem:[%s9 + $0x18] sm:$0xff]
        %v1142 = vld [vmem:[%s9 + $0x20] sm:$0xff]
        %v1143 = vld [vmem:[%s9 + $0x28] sm:$0xff]
        %v1144 = vld [vmem:[%s9 + $0x30] sm:$0xff]
        %v1145 = vld [vmem:[%s9 + $0x38] sm:$0xff]
        %v1146 = vld [vmem:[#allocation11] sm:$0x1]
        %v1148 = vlaneseq
        %v1149 = vshrl.u32 %v1148, 7
        %v1150 = vsub.s32 0, %v1149
        %v1151 = vrot.slane %v1146, %v1150
        %v1154 = vsel %vm927, %v1134, 0
        %v1157 = vsel %vm927, %v1135, 0
        %v1160 = vsel %vm927, %v1136, 0
        %v1163 = vsel %vm927, %v1137, 0
        %1165 = vmatprep.subr.mxu0 0.0
        %1166 = vmatpush1.msra.mxu0 %v1138
        %1167 = vmatprep.subr.mxu0 0.0
        %1168 = vmatpush1.msra.mxu0 %v1139
        %1169 = vmatprep.subr.mxu0 0.0
        %1170 = vmatpush1.msra.mxu0 %v1140
        %1171 = vmatprep.subr.mxu0 0.0
        %1172 = vmatpush1.msra.mxu0 %v1141
        %1173 = vmatprep.subr.mxu0 0.0
        %1174 = vmatpush1.msra.mxu0 %v1142
        %1175 = vmatprep.subr.mxu0 0.0
        %1176 = vmatpush1.msra.mxu0 %v1143
        %1177 = vmatprep.subr.mxu0 0.0
        %1178 = vmatpush1.msra.mxu0 %v1144
        %1179 = vmatprep.subr.mxu0 0.0
        %1180 = vmatpush1.msra.mxu0 %v1145
        %1181 = vmatprep.subr.mxu0 0.0
        %1182 = vmatpush1.msra.mxu0 0.0
        %1183 = vmatprep.subr.mxu0 0.0
        %1184 = vmatpush1.msra.mxu0 0.0
        %1185 = vmatprep.subr.mxu0 0.0
        %1186 = vmatpush1.msra.mxu0 0.0
        %1187 = vmatprep.subr.mxu0 0.0
        %1188 = vmatpush1.msra.mxu0 0.0
        %1189 = vmatprep.subr.mxu0 0.0
        %1190 = vmatpush1.msra.mxu0 0.0
        %1191 = vmatprep.subr.mxu0 0.0
        %1192 = vmatpush1.msra.mxu0 0.0
        %1193 = vmatprep.subr.mxu0 0.0
        %1194 = vmatpush1.msra.mxu0 0.0
        %1195 = vmatprep.subr.mxu0 0.0
        %1196 = vmatpush1.msra.mxu0 0.0
        %1197 = vmatprep.subr.mxu0 0.0
        %1198 = vmatpush1.msra.mxu0 0.0
        %1199 = vmatprep.subr.mxu0 0.0
        %1200 = vmatpush1.msra.mxu0 0.0
        %1201 = vmatprep.subr.mxu0 0.0
        %1202 = vmatpush1.msra.mxu0 0.0
        %1203 = vmatprep.subr.mxu0 0.0
        %1204 = vmatpush1.msra.mxu0 0.0
        %1205 = vmatprep.subr.mxu0 0.0
        %1206 = vmatpush1.msra.mxu0 0.0
        %1207 = vmatprep.subr.mxu0 0.0
        %1208 = vmatpush1.msra.mxu0 0.0
        %1209 = vmatprep.subr.mxu0 0.0
        %1210 = vmatpush1.msra.mxu0 0.0
        %1211 = vmatprep.subr.mxu0 0.0
        %1212 = vmatpush1.msra.mxu0 0.0
        %1213 = vmatprep.subr.mxu0 0.0
        %1214 = vmatpush1.msra.mxu0 0.0
        %1215 = vmatprep.subr.mxu0 0.0
        %1216 = vmatpush1.msra.mxu0 0.0
        %1217 = vmatprep.subr.mxu0 0.0
        %1218 = vmatpush1.msra.mxu0 0.0
        %1219 = vmatprep.subr.mxu0 0.0
        %1220 = vmatpush1.msra.mxu0 0.0
        %1221 = vmatprep.subr.mxu0 0.0
        %1222 = vmatpush1.msra.mxu0 0.0
        %1223 = vmatprep.subr.mxu0 0.0
        %1224 = vmatpush1.msra.mxu0 0.0
        %1225 = vmatprep.subr.mxu0 0.0
        %1226 = vmatpush1.msra.mxu0 0.0
        %1227 = vmatprep.subr.mxu0 0.0
        %1228 = vmatpush1.msra.mxu0 0.0
        %1229 = vmatprep.mubr.f32.mxu0 0.0
        %1230 = vmatmul.mubr.f32.gmra.mrb[0].mxu0 %v1154
        %v1231 = vpop.f32.mrb[0].mxu0
        %v1232 = vadd.f32 %v1151, %v1231
        %v1233 = vpop.f32.mrb[0].mxu0
        %1234 = vmatprep.mubr.f32.mxu0 0.0
        %1235 = vmatmul.mubr.f32.gmra.mrb[0].mxu0 %v1157
        %v1236 = vpop.f32.mrb[0].mxu0
        %v1237 = vadd.f32 %v1151, %v1236
        %v1238 = vpop.f32.mrb[0].mxu0
        %1239 = vmatprep.mubr.f32.mxu0 0.0
        %1240 = vmatmul.mubr.f32.gmra.mrb[0].mxu0 %v1160
        %v1241 = vpop.f32.mrb[0].mxu0
        %v1242 = vadd.f32 %v1151, %v1241
        %v1243 = vpop.f32.mrb[0].mxu0
        %1244 = vmatprep.mubr.f32.mxu0 0.0
        %1245 = vmatmul.mubr.f32.gmra.mrb[0].mxu0 %v1163
        %v1246 = vpop.f32.mrb[0].mxu0
        %v1247 = vadd.f32 %v1151, %v1246
        %v1248 = vpop.f32.mrb[0].mxu0
        %1249 = vdwg.mxu0
        %v1250 = vmax.f32 %v1232, 0.0
        %v1251 = vmax.f32 %v1237, 0.0
        %v1252 = vmax.f32 %v1242, 0.0
        %v1253 = vmax.f32 %v1247, 0.0
        %v1254 = vld [vmem:[#allocation13] sm:$0xff]
        %v1255 = vld [vmem:[#allocation13 + $0x8] sm:$0xff]
        %v1256 = vld [vmem:[#allocation13 + $0x10] sm:$0xff]
        %v1257 = vld [vmem:[#allocation13 + $0x18] sm:$0xff]
        %v1258 = vld [vmem:[#allocation13 + $0x20] sm:$0xff]
        %v1259 = vld [vmem:[#allocation13 + $0x28] sm:$0xff]
        %v1260 = vld [vmem:[#allocation13 + $0x30] sm:$0xff]
        %v1261 = vld [vmem:[#allocation13 + $0x38] sm:$0xff]
        %v1262 = vld [vmem:[#allocation13 + $0x40] sm:$0xff]
        %v1263 = vld [vmem:[#allocation13 + $0x48] sm:$0xff]
        %v1264 = vld [vmem:[#allocation13 + $0x50] sm:$0xff]
        %v1265 = vld [vmem:[#allocation13 + $0x58] sm:$0xff]
        %v1266 = vld [vmem:[#allocation13 + $0x60] sm:$0xff]
        %v1267 = vld [vmem:[#allocation13 + $0x68] sm:$0xff]
        %v1268 = vld [vmem:[#allocation13 + $0x70] sm:$0xff]
        %v1269 = vld [vmem:[#allocation13 + $0x78] sm:$0xff]
        %v1270 = vld [vmem:[#allocation13 + $0x80] sm:$0xff]
        %v1271 = vld [vmem:[#allocation13 + $0x88] sm:$0xff]
        %v1272 = vld [vmem:[#allocation13 + $0x90] sm:$0xff]
        %v1273 = vld [vmem:[#allocation13 + $0x98] sm:$0xff]
        %v1274 = vld [vmem:[#allocation13 + $0xa0] sm:$0xff]
        %v1275 = vld [vmem:[#allocation13 + $0xa8] sm:$0xff]
        %v1276 = vld [vmem:[#allocation13 + $0xb0] sm:$0xff]
        %v1277 = vld [vmem:[#allocation13 + $0xb8] sm:$0xff]
        %v1278 = vld [vmem:[#allocation13 + $0xc0] sm:$0xff]
        %v1279 = vld [vmem:[#allocation13 + $0xc8] sm:$0xff]
        %v1280 = vld [vmem:[#allocation13 + $0xd0] sm:$0xff]
        %v1281 = vld [vmem:[#allocation13 + $0xd8] sm:$0xff]
        %v1282 = vld [vmem:[#allocation13 + $0xe0] sm:$0xff]
        %v1283 = vld [vmem:[#allocation13 + $0xe8] sm:$0xff]
        %v1284 = vld [vmem:[#allocation13 + $0xf0] sm:$0xff]
        %v1285 = vld [vmem:[#allocation13 + $0xf8] sm:$0xff]
        %v1286 = vld [vmem:[#allocation13 + $0x100] sm:$0xff]
        %v1287 = vld [vmem:[#allocation13 + $0x108] sm:$0xff]
        %v1288 = vld [vmem:[#allocation13 + $0x110] sm:$0xff]
        %v1289 = vld [vmem:[#allocation13 + $0x118] sm:$0xff]
        %v1290 = vld [vmem:[#allocation13 + $0x120] sm:$0xff]
        %v1291 = vld [vmem:[#allocation13 + $0x128] sm:$0xff]
        %v1292 = vld [vmem:[#allocation13 + $0x130] sm:$0xff]
        %v1293 = vld [vmem:[#allocation13 + $0x138] sm:$0xff]
        %v1294 = vld [vmem:[#allocation13 + $0x140] sm:$0xff]
        %v1295 = vld [vmem:[#allocation13 + $0x148] sm:$0xff]
        %v1296 = vld [vmem:[#allocation13 + $0x150] sm:$0xff]
        %v1297 = vld [vmem:[#allocation13 + $0x158] sm:$0xff]
        %v1298 = vld [vmem:[#allocation13 + $0x160] sm:$0xff]
        %v1299 = vld [vmem:[#allocation13 + $0x168] sm:$0xff]
        %v1300 = vld [vmem:[#allocation13 + $0x170] sm:$0xff]
        %v1301 = vld [vmem:[#allocation13 + $0x178] sm:$0xff]
        %v1302 = vld [vmem:[#allocation13 + $0x180] sm:$0xff]
        %v1303 = vld [vmem:[#allocation13 + $0x188] sm:$0xff]
        %v1304 = vld [vmem:[#allocation13 + $0x190] sm:$0xff]
        %v1305 = vld [vmem:[#allocation13 + $0x198] sm:$0xff]
        %v1306 = vld [vmem:[#allocation13 + $0x1a0] sm:$0xff]
        %v1307 = vld [vmem:[#allocation13 + $0x1a8] sm:$0xff]
        %v1308 = vld [vmem:[#allocation13 + $0x1b0] sm:$0xff]
        %v1309 = vld [vmem:[#allocation13 + $0x1b8] sm:$0xff]
        %v1310 = vld [vmem:[#allocation13 + $0x1c0] sm:$0xff]
        %v1311 = vld [vmem:[#allocation13 + $0x1c8] sm:$0xff]
        %v1312 = vld [vmem:[#allocation13 + $0x1d0] sm:$0xff]
        %v1313 = vld [vmem:[#allocation13 + $0x1d8] sm:$0xff]
        %v1314 = vld [vmem:[#allocation13 + $0x1e0] sm:$0xff]
        %v1315 = vld [vmem:[#allocation13 + $0x1e8] sm:$0xff]
        %v1316 = vld [vmem:[#allocation13 + $0x1f0] sm:$0xff]
        %v1317 = vld [vmem:[#allocation13 + $0x1f8] sm:$0xff]
        %v1318 = vld [vmem:[%s12] sm:$0xf]
        %v1320 = vlaneseq
        %v1321 = vshrl.u32 %v1320, 7
        %v1322 = vsub.s32 0, %v1321
        %v1323 = vrot.slane %v1318, %v1322
        %v1324 = vlaneseq
        %v1325 = vshrl.u32 %v1324, 7
        %v1326 = vsub.s32 1, %v1325
        %v1327 = vrot.slane %v1318, %v1326
        %v1328 = vlaneseq
        %v1329 = vshrl.u32 %v1328, 7
        %v1330 = vsub.s32 2, %v1329
        %v1331 = vrot.slane %v1318, %v1330
        %v1332 = vlaneseq
        %v1333 = vshrl.u32 %v1332, 7
        %v1334 = vsub.s32 3, %v1333
        %v1335 = vrot.slane %v1318, %v1334
        %1340 = vmatprep.subr.mxu0 %v1255
        %1341 = vmatpush1.msra.mxu0 %v1254
        %1342 = vmatprep.subr.mxu0 %v1259
        %1343 = vmatpush1.msra.mxu0 %v1258
        %1344 = vmatprep.subr.mxu0 %v1263
        %1345 = vmatpush1.msra.mxu0 %v1262
        %1346 = vmatprep.subr.mxu0 %v1267
        %1347 = vmatpush1.msra.mxu0 %v1266
        %1348 = vmatprep.subr.mxu0 %v1271
        %1349 = vmatpush1.msra.mxu0 %v1270
        %1350 = vmatprep.subr.mxu0 %v1275
        %1351 = vmatpush1.msra.mxu0 %v1274
        %1352 = vmatprep.subr.mxu0 %v1279
        %1353 = vmatpush1.msra.mxu0 %v1278
        %1354 = vmatprep.subr.mxu0 %v1283
        %1355 = vmatpush1.msra.mxu0 %v1282
        %1356 = vmatprep.subr.mxu0 %v1287
        %1357 = vmatpush1.msra.mxu0 %v1286
        %1358 = vmatprep.subr.mxu0 %v1291
        %1359 = vmatpush1.msra.mxu0 %v1290
        %1360 = vmatprep.subr.mxu0 %v1295
        %1361 = vmatpush1.msra.mxu0 %v1294
        %1362 = vmatprep.subr.mxu0 %v1299
        %1363 = vmatpush1.msra.mxu0 %v1298
        %1364 = vmatprep.subr.mxu0 %v1303
        %1365 = vmatpush1.msra.mxu0 %v1302
        %1366 = vmatprep.subr.mxu0 %v1307
        %1367 = vmatpush1.msra.mxu0 %v1306
        %1368 = vmatprep.subr.mxu0 %v1311
        %1369 = vmatpush1.msra.mxu0 %v1310
        %1370 = vmatprep.subr.mxu0 %v1315
        %1371 = vmatpush1.msra.mxu0 %v1314
        %1372 = vmatprep.subr.mxu0 0.0
        %1373 = vmatpush1.msra.mxu0 0.0
        %1374 = vmatprep.subr.mxu0 0.0
        %1375 = vmatpush1.msra.mxu0 0.0
        %1376 = vmatprep.subr.mxu0 0.0
        %1377 = vmatpush1.msra.mxu0 0.0
        %1378 = vmatprep.subr.mxu0 0.0
        %1379 = vmatpush1.msra.mxu0 0.0
        %1380 = vmatprep.subr.mxu0 0.0
        %1381 = vmatpush1.msra.mxu0 0.0
        %1382 = vmatprep.subr.mxu0 0.0
        %1383 = vmatpush1.msra.mxu0 0.0
        %1384 = vmatprep.subr.mxu0 0.0
        %1385 = vmatpush1.msra.mxu0 0.0
        %1386 = vmatprep.subr.mxu0 0.0
        %1387 = vmatpush1.msra.mxu0 0.0
        %1388 = vmatprep.subr.mxu0 0.0
        %1389 = vmatpush1.msra.mxu0 0.0
        %1390 = vmatprep.subr.mxu0 0.0
        %1391 = vmatpush1.msra.mxu0 0.0
        %1392 = vmatprep.subr.mxu0 0.0
        %1393 = vmatpush1.msra.mxu0 0.0
        %1394 = vmatprep.subr.mxu0 0.0
        %1395 = vmatpush1.msra.mxu0 0.0
        %1396 = vmatprep.subr.mxu0 0.0
        %1397 = vmatpush1.msra.mxu0 0.0
        %1398 = vmatprep.subr.mxu0 0.0
        %1399 = vmatpush1.msra.mxu0 0.0
        %1400 = vmatprep.subr.mxu0 0.0
        %1401 = vmatpush1.msra.mxu0 0.0
        %1402 = vmatprep.subr.mxu0 0.0
        %1403 = vmatpush1.msra.mxu0 0.0
        %1404 = vmatprep.mubr.f32.mxu0 0.0
        %1405 = vmatmul.mubr.f32.gmra.mrb[0].mxu0 %v1250
        %v1406 = vpop.f32.mrb[0].mxu0
        %v1407 = vadd.f32 %v1323, %v1406
        %v1408 = vpop.f32.mrb[0].mxu0
        %v1409 = vadd.f32 %v1327, %v1408
        %1410 = vmatprep.mubr.f32.mxu0 0.0
        %1411 = vmatmul.mubr.f32.gmra.mrb[0].mxu0 %v1251
        %v1412 = vpop.f32.mrb[0].mxu0
        %v1413 = vadd.f32 %v1323, %v1412
        %v1414 = vpop.f32.mrb[0].mxu0
        %v1415 = vadd.f32 %v1327, %v1414
        %1416 = vmatprep.mubr.f32.mxu0 0.0
        %1417 = vmatmul.mubr.f32.gmra.mrb[0].mxu0 %v1252
        %v1418 = vpop.f32.mrb[0].mxu0
        %v1419 = vadd.f32 %v1323, %v1418
        %v1420 = vpop.f32.mrb[0].mxu0
        %v1421 = vadd.f32 %v1327, %v1420
        %1422 = vmatprep.mubr.f32.mxu0 0.0
        %1423 = vmatmul.mubr.f32.gmra.mrb[0].mxu0 %v1253
        %v1424 = vpop.f32.mrb[0].mxu0
        %v1425 = vadd.f32 %v1323, %v1424
        %v1426 = vpop.f32.mrb[0].mxu0
        %v1427 = vadd.f32 %v1327, %v1426
        %1428 = vdwg.mxu0
        %1429 = vmatprep.subr.mxu0 %v1257
        %1430 = vmatpush1.msra.mxu0 %v1256
        %1431 = vmatprep.subr.mxu0 %v1261
        %1432 = vmatpush1.msra.mxu0 %v1260
        %1433 = vmatprep.subr.mxu0 %v1265
        %1434 = vmatpush1.msra.mxu0 %v1264
        %1435 = vmatprep.subr.mxu0 %v1269
        %1436 = vmatpush1.msra.mxu0 %v1268
        %1437 = vmatprep.subr.mxu0 %v1273
        %1438 = vmatpush1.msra.mxu0 %v1272
        %1439 = vmatprep.subr.mxu0 %v1277
        %1440 = vmatpush1.msra.mxu0 %v1276
        %1441 = vmatprep.subr.mxu0 %v1281
        %1442 = vmatpush1.msra.mxu0 %v1280
        %1443 = vmatprep.subr.mxu0 %v1285
        %1444 = vmatpush1.msra.mxu0 %v1284
        %1445 = vmatprep.subr.mxu0 %v1289
        %1446 = vmatpush1.msra.mxu0 %v1288
        %1447 = vmatprep.subr.mxu0 %v1293
        %1448 = vmatpush1.msra.mxu0 %v1292
        %1449 = vmatprep.subr.mxu0 %v1297
        %1450 = vmatpush1.msra.mxu0 %v1296
        %1451 = vmatprep.subr.mxu0 %v1301
        %1452 = vmatpush1.msra.mxu0 %v1300
        %1453 = vmatprep.subr.mxu0 %v1305
        %1454 = vmatpush1.msra.mxu0 %v1304
        %1455 = vmatprep.subr.mxu0 %v1309
        %1456 = vmatpush1.msra.mxu0 %v1308
        %1457 = vmatprep.subr.mxu0 %v1313
        %1458 = vmatpush1.msra.mxu0 %v1312
        %1459 = vmatprep.subr.mxu0 %v1317
        %1460 = vmatpush1.msra.mxu0 %v1316
        %1461 = vmatprep.subr.mxu0 0.0
        %1462 = vmatpush1.msra.mxu0 0.0
        %1463 = vmatprep.subr.mxu0 0.0
        %1464 = vmatpush1.msra.mxu0 0.0
        %1465 = vmatprep.subr.mxu0 0.0
        %1466 = vmatpush1.msra.mxu0 0.0
        %1467 = vmatprep.subr.mxu0 0.0
        %1468 = vmatpush1.msra.mxu0 0.0
        %1469 = vmatprep.subr.mxu0 0.0
        %1470 = vmatpush1.msra.mxu0 0.0
        %1471 = vmatprep.subr.mxu0 0.0
        %1472 = vmatpush1.msra.mxu0 0.0
        %1473 = vmatprep.subr.mxu0 0.0
        %1474 = vmatpush1.msra.mxu0 0.0
        %1475 = vmatprep.subr.mxu0 0.0
        %1476 = vmatpush1.msra.mxu0 0.0
        %1477 = vmatprep.subr.mxu0 0.0
        %1478 = vmatpush1.msra.mxu0 0.0
        %1479 = vmatprep.subr.mxu0 0.0
        %1480 = vmatpush1.msra.mxu0 0.0
        %1481 = vmatprep.subr.mxu0 0.0
        %1482 = vmatpush1.msra.mxu0 0.0
        %1483 = vmatprep.subr.mxu0 0.0
        %1484 = vmatpush1.msra.mxu0 0.0
        %1485 = vmatprep.subr.mxu0 0.0
        %1486 = vmatpush1.msra.mxu0 0.0
        %1487 = vmatprep.subr.mxu0 0.0
        %1488 = vmatpush1.msra.mxu0 0.0
        %1489 = vmatprep.subr.mxu0 0.0
        %1490 = vmatpush1.msra.mxu0 0.0
        %1491 = vmatprep.subr.mxu0 0.0
        %1492 = vmatpush1.msra.mxu0 0.0
        %1493 = vmatprep.mubr.f32.mxu0 0.0
        %1494 = vmatmul.mubr.f32.gmra.mrb[0].mxu0 %v1250
        %v1495 = vpop.f32.mrb[0].mxu0
        %v1496 = vadd.f32 %v1331, %v1495
        %v1497 = vpop.f32.mrb[0].mxu0
        %v1498 = vadd.f32 %v1335, %v1497
        %1499 = vmatprep.mubr.f32.mxu0 0.0
        %1500 = vmatmul.mubr.f32.gmra.mrb[0].mxu0 %v1251
        %v1501 = vpop.f32.mrb[0].mxu0
        %v1502 = vadd.f32 %v1331, %v1501
        %v1503 = vpop.f32.mrb[0].mxu0
        %v1504 = vadd.f32 %v1335, %v1503
        %1505 = vmatprep.mubr.f32.mxu0 0.0
        %1506 = vmatmul.mubr.f32.gmra.mrb[0].mxu0 %v1252
        %v1507 = vpop.f32.mrb[0].mxu0
        %v1508 = vadd.f32 %v1331, %v1507
        %v1509 = vpop.f32.mrb[0].mxu0
        %v1510 = vadd.f32 %v1335, %v1509
        %1511 = vmatprep.mubr.f32.mxu0 0.0
        %1512 = vmatmul.mubr.f32.gmra.mrb[0].mxu0 %v1253
        %v1513 = vpop.f32.mrb[0].mxu0
        %v1514 = vadd.f32 %v1331, %v1513
        %v1515 = vpop.f32.mrb[0].mxu0
        %v1516 = vadd.f32 %v1335, %v1515
        %1517 = vdwg.mxu0
        %v1518 = vtanh.pop %v1407
        %v1519 = vtanh.pop %v1409
        %v1520 = vtanh.pop %v1496
        %v1521 = vtanh.pop %v1498
        %v1522 = vtanh.pop %v1413
        %v1523 = vtanh.pop %v1415
        %v1524 = vtanh.pop %v1502
        %v1525 = vtanh.pop %v1504
        %v1526 = vtanh.pop %v1419
        %v1527 = vtanh.pop %v1421
        %v1528 = vtanh.pop %v1508
        %v1529 = vtanh.pop %v1510
        %v1530 = vtanh.pop %v1425
        %v1531 = vtanh.pop %v1427
        %v1532 = vtanh.pop %v1514
        %v1533 = vtanh.pop %v1516
        %1534 = vst [vmem:[%s530] sm:$0xff] %v1518
        %1535 = vst [vmem:[%s530 + $0x8] sm:$0xff] %v1519
        %1536 = vst [vmem:[%s530 + $0x10] sm:$0xff] %v1520
        %1537 = vst [vmem:[%s530 + $0x18] sm:$0xff] %v1521
        %1538 = vst [vmem:[%s530 + $0x20] sm:$0xff] %v1522
        %1539 = vst [vmem:[%s530 + $0x28] sm:$0xff] %v1523
        %1540 = vst [vmem:[%s530 + $0x30] sm:$0xff] %v1524
        %1541 = vst [vmem:[%s530 + $0x38] sm:$0xff] %v1525
        %1542 = vst [vmem:[%s530 + $0x40] sm:$0xff] %v1526
        %1543 = vst [vmem:[%s530 + $0x48] sm:$0xff] %v1527
        %1544 = vst [vmem:[%s530 + $0x50] sm:$0xff] %v1528
        %1545 = vst [vmem:[%s530 + $0x58] sm:$0xff] %v1529
        %1546 = vst [vmem:[%s530 + $0x60] sm:$0xff] %v1530
        %1547 = vst [vmem:[%s530 + $0x68] sm:$0xff] %v1531
        %1548 = vst [vmem:[%s530 + $0x70] sm:$0xff] %v1532
        %1549 = vst [vmem:[%s530 + $0x78] sm:$0xff] %v1533
        %s1550 = sand.u32 %s317, 1
        %s1551 = scalar_lea.sflag [#allocation4], %s1550
        %s1552 = sand.u32 %s317, 1
        %s1553 = smul.addr %s1552, 128
        %s1554 = scalar_lea.vmem [#allocation14], %s1553
        // Predicated region
        $region101: #{tpu_custom_call.1} parent=71 // pred_check
          %p1555 = pneg %p327
        $region102: #{tpu_custom_call.1} parent=71 // pred_check_branch
          %1557 = sbr.rel (%p1555) target = $region104
        $region103: #{tpu_custom_call.1} parent=71 // pred_region
          %s1558 = smul.u32 4, %s31
          %s1560 = ssub.s32 2048, 2048
          %1561 = vsyncadd %s1551, %s1560
          %s1562 = smul.addr %s1558, 4
          %s1563 = smul.addr %s1562, 128
          %s1564 = scalar_lea.hbm %s13, %s1563
          %s1565 = sshll.u32 %s1554, 4
          %s1566 = int_to_ptr.vmem [resolvable:$true] %s1565
          %1571 = dma.vmem_to_hbm [thread:$0]  %s1566, 2048, %s1564, %s1551, 512, 512, 32
        $region104: #{tpu_custom_call.1} parent=71 // pred_fallthru
          _
      $region72: #{tpu_custom_call.1} parent=5 // pred_fallthru
        _
      %p1572 = scmp.le.s32.totalorder 2, %s26
      // Predicated region
      $region105: #{tpu_custom_call.1} parent=5 // pred_check
        %p1573 = pneg %p1572
      $region106: #{tpu_custom_call.1} parent=5 // pred_check_branch
        %1575 = sbr.rel (%p1573) target = $region108
      $region107: #{tpu_custom_call.1} parent=5 // pred_region
        %s1576 = ssub.s32 %s26, 2
        // Predicated region
        $region109: #{tpu_custom_call.1} parent=107 // pred_check
          %p1577 = pneg %p333
        $region110: #{tpu_custom_call.1} parent=107 // pred_check_branch
          %1579 = sbr.rel (%p1577) target = $region112
        $region111: #{tpu_custom_call.1} parent=107 // pred_region
          %s1580 = sand.u32 %s318, 1
          %s1581 = scalar_lea.sflag [#allocation4], %s1580
          %s1582 = sand.u32 %s318, 1
          %s1583 = smul.addr %s1582, 128
          %s1584 = scalar_lea.vmem [#allocation14], %s1583
          %1585 = dma.done %s1581, 2048
        $region112: #{tpu_custom_call.1} parent=107 // pred_fallthru
          _
      $region108: #{tpu_custom_call.1} parent=5 // pred_fallthru
        _
    $region6: #{tpu_custom_call.1} parent=1 // loop_footer
      %s30 = sadd.s32 1, %s26
    $region7: #{tpu_custom_call.1} parent=1 // loop_footer_branch
      %25 = sbr.rel target = $region3
    $region8: #{tpu_custom_call.1} parent=1 // loop_exit
      _
    %1586 = vsyncpa [#allocation3], 1
    %s1587 = scalar_lea.sflag [#allocation3], 1
    %1588 = vsyncpa %s1587, 1
    %1589 = vsyncpa [#allocation6], 1
    %1590 = vsyncpa [#allocation9], 1
    %1591 = vsyncpa [#allocation12], 1
    %1592 = vsyncpa [#allocation4], 1
    %s1593 = scalar_lea.sflag [#allocation4], 1
    %1594 = vsyncpa %s1593, 1

</llo_original>
